<compile_context>
chip_gen: v7x
topology: tpu7x:2x2x1
jax: 0.10.0
libtpu: 0.0.40
codegen_flags: <defaults>
</compile_context>

<pallas_src>
import functools

import numpy as np
import jax
import jax.numpy as jnp
from jax.experimental import pallas as pl
from jax.experimental.pallas import tpu as pltpu

VMEM = pltpu.MemorySpace.VMEM


# ----------------------------- fused kernel ----------------------------------

def _vat_fused_kernel(x_ref, w_ref, b_ref, r0_ref, loss_ref, *,
                      xi, eps, vat_iter, num_classes, inv_b):
    x = x_ref[...]                       # (B, D)  f32
    w = w_ref[...]                       # (D, Cp) f32, class-padded with zeros
    b = b_ref[...]                       # (1, Cp) f32, class-padded with zeros

    x_bf = x.astype(jnp.bfloat16)        # bf16 MXU operands, f32 accumulation
    w_bf = w.astype(jnp.bfloat16)

    cp = w.shape[1]
    valid = jax.lax.broadcasted_iota(jnp.int32, (1, cp), 1) < num_classes

    def model_fwd(inp_bf):
        """logits = inp @ W + b ; returns (log_softmax, softmax) over valid classes."""
        logits = jnp.dot(inp_bf, w_bf, preferred_element_type=jnp.float32) + b
        logits = jnp.where(valid, logits, -1e30)          # mask padded classes
        m = jnp.max(logits, axis=-1, keepdims=True)
        s = logits - m
        e = jnp.exp(s)
        z = jnp.sum(e, axis=-1, keepdims=True)
        logq = s - jnp.log(z)
        q = e * pl.reciprocal(z, approx=True)             # EUP reciprocal
        return logq, q

    def l2norm(r):
        """PyTorch L2Norm: r / (per-sample L2 norm over non-batch dims + 1e-10)."""
        nrm = jnp.sqrt(jnp.sum(r * r, axis=-1, keepdims=True))
        return r * pl.reciprocal(nrm + 1e-10, approx=True)

    # pred = softmax(model(x))  (detached target), logp = log_softmax(model(x))
    logp, pred = model_fwd(x_bf)

    # r = randn(x.shape) - 0.5 (done in wrapper) ; r = L2Norm(r)
    r = l2norm(r0_ref[...])

    # power iteration (vat_iter is tiny -> unrolled)
    for _ in range(vat_iter):
        adv = x + xi * r
        _, q_adv = model_fwd(adv.astype(jnp.bfloat16))
        # analytic grad of batchmean-KL(pred || log_softmax(model(x + xi*r))) w.r.t. r
        # for the linear model:  (xi / B) * (softmax_adv - pred) @ W^T.
        # The uniform xi and 1/B factors cancel under the subsequent L2Norm -> dropped.
        g_logits = jnp.where(valid, q_adv - pred, 0.0)
        g = jax.lax.dot_general(
            g_logits.astype(jnp.bfloat16), w_bf,
            dimension_numbers=(((1,), (1,)), ((), ())),   # contract class axis (W^T)
            preferred_element_type=jnp.float32)
        r = l2norm(g)

    # final adversarial example and batchmean KL
    adv_img = x + eps * r
    logq_f, _ = model_fwd(adv_img.astype(jnp.bfloat16))
    t = jnp.where(valid, pred * (logp - logq_f), 0.0)
    row = jnp.sum(t, axis=-1, keepdims=True)              # (B, 1)
    loss_ref[...] = jnp.sum(row, axis=0, keepdims=True) * inv_b   # (1, 1)


# ----------------------------- wrapper ----------------------------------------

def vat_loss(x_nchw, W, b2, rng_key, *, xi, eps, vat_iter):
    B = x_nchw.shape[0]
    D = int(np.prod(x_nchw.shape[1:]))
    C = W.shape[1]
    x_flat = x_nchw.reshape(B, D).astype(jnp.float32)

    # lane-dense class axis: zero-pad W / b up to a multiple of 128; padded
    # logits are masked to -1e30 inside the kernel, so softmax/KL are unchanged.
    Cp = ((C + 127) // 128) * 128
    W_p = jnp.pad(W.astype(jnp.float32), ((0, 0), (0, Cp - C)))
    b_p = jnp.pad(b2.astype(jnp.float32), ((0, 0), (0, Cp - C)))

    # r = torch.randn(x.shape).sub(0.5)  (faithful to the given spec)
    r0 = jax.random.normal(rng_key, (B, D), dtype=jnp.float32) - 0.5

    kern = functools.partial(
        _vat_fused_kernel,
        xi=float(xi), eps=float(eps), vat_iter=int(vat_iter),
        num_classes=int(C), inv_b=1.0 / B)

    loss = pl.pallas_call(
        kern,
        out_shape=jax.ShapeDtypeStruct((1, 1), jnp.float32),
        in_specs=[pl.BlockSpec(memory_space=VMEM)] * 4,
        out_specs=pl.BlockSpec(memory_space=VMEM),
        compiler_params=pltpu.CompilerParams(vmem_limit_bytes=32 * 1024 * 1024),
    )(x_flat, W_p, b_p, r0)
    return loss[0, 0]


# ----------------------------- main --------------------------------------------

if __name__ == "__main__":
    key = jax.random.PRNGKey(0)
    kx, kw, kb, kr = jax.random.split(key, 4)

    # small shapes consistent with an NCHW conv-style input
    B, C, H, Wd = 2, 4, 16, 16
    NUM_CLASSES = 10
    D = C * H * Wd

    x = jax.random.normal(kx, (B, C, H, Wd), dtype=jnp.float32)

    # deterministic synthetic "model" parameters (linear classifier)
    W_param = jax.random.normal(kw, (D, NUM_CLASSES), dtype=jnp.float32) * 0.02
    b_param = jax.random.normal(kb, (1, NUM_CLASSES), dtype=jnp.float32) * 0.01

    loss = vat_loss(x, W_param, b_param, kr, xi=10.0, eps=2.0, vat_iter=2)
    loss = jax.block_until_ready(loss)
    assert np.isfinite(np.asarray(loss))
    print("KERNEL_OK")
</pallas_src>

<mosaic_0001>
module attributes {stable_mosaic.version = 11 : i64} {
  func.func @_vat_fused_kernel(%arg0: memref<2x1024xf32, #tpu.memory_space<vmem>>, %arg1: memref<1024x128xf32, #tpu.memory_space<vmem>>, %arg2: memref<1x128xf32, #tpu.memory_space<vmem>>, %arg3: memref<2x1024xf32, #tpu.memory_space<vmem>>, %arg4: memref<1x1xf32, #tpu.memory_space<vmem>>) attributes {dimension_semantics = [], scalar_prefetch = 0 : i64, scratch_operands = 0 : i64, tpu.core_type = #tpu.core_type<tc>} {
    %c0 = arith.constant 0 : index
    %c0_0 = arith.constant 0 : index
    %0 = vector.load %arg0[%c0, %c0_0] : memref<2x1024xf32, #tpu.memory_space<vmem>>, vector<2x1024xf32>
    %c0_1 = arith.constant 0 : index
    %c0_2 = arith.constant 0 : index
    %1 = vector.load %arg1[%c0_1, %c0_2] : memref<1024x128xf32, #tpu.memory_space<vmem>>, vector<1024x128xf32>
    %c0_3 = arith.constant 0 : index
    %c0_4 = arith.constant 0 : index
    %2 = vector.load %arg2[%c0_3, %c0_4] : memref<1x128xf32, #tpu.memory_space<vmem>>, vector<1x128xf32>
    %3 = arith.truncf %0 : vector<2x1024xf32> to vector<2x1024xbf16>
    %4 = arith.truncf %1 : vector<1024x128xf32> to vector<1024x128xbf16>
    %5 = tpu.iota {dimensions = array<i32: 1>} : vector<1x128xi32>
    %c10_i32 = arith.constant 10 : i32
    %6 = vector.broadcast %c10_i32 : i32 to vector<1x128xi32>
    %7 = arith.cmpi slt, %5, %6 : vector<1x128xi32>
    %cst = arith.constant dense<0.000000e+00> : vector<2x128xf32>
    %8 = tpu.matmul %3, %4, %cst {dimension_numbers = #tpu.dot_dimension_numbers<[1], [0], [0], [1], [0, 0, 1, 1], [], []>} : vector<2x1024xbf16>, vector<1024x128xbf16>, vector<2x128xf32> -> vector<2x128xf32>
    %9 = vector.broadcast %2 : vector<1x128xf32> to vector<2x128xf32>
    %10 = arith.addf %8, %9 : vector<2x128xf32>
    %cst_5 = arith.constant -1.000000e+30 : f32
    %11 = vector.shape_cast %7 : vector<1x128xi1> to vector<1x128xi1>
    %12 = vector.broadcast %11 : vector<1x128xi1> to vector<2x128xi1>
    %13 = vector.broadcast %cst_5 : f32 to vector<2x128xf32>
    %14 = arith.select %12, %10, %13 : vector<2x128xi1>, vector<2x128xf32>
    %cst_6 = arith.constant dense<0xFF800000> : vector<2xf32>
    %15 = vector.multi_reduction <maximumf>, %14, %cst_6 [1] : vector<2x128xf32> to vector<2xf32>
    %16 = vector.shape_cast %15 : vector<2xf32> to vector<2x1xf32>
    %17 = vector.broadcast %16 : vector<2x1xf32> to vector<2x128xf32>
    %18 = arith.subf %14, %17 : vector<2x128xf32>
    %19 = math.exp %18 : vector<2x128xf32>
    %cst_7 = arith.constant dense<0.000000e+00> : vector<2xf32>
    %20 = vector.multi_reduction <add>, %19, %cst_7 [1] : vector<2x128xf32> to vector<2xf32>
    %21 = vector.shape_cast %20 : vector<2xf32> to vector<2x1xf32>
    %22 = math.log %21 : vector<2x1xf32>
    %23 = vector.broadcast %22 : vector<2x1xf32> to vector<2x128xf32>
    %24 = arith.subf %18, %23 : vector<2x128xf32>
    %25 = tpu.reciprocal %21 {approx = true} : vector<2x1xf32> -> vector<2x1xf32>
    %26 = vector.broadcast %25 : vector<2x1xf32> to vector<2x128xf32>
    %27 = arith.mulf %19, %26 : vector<2x128xf32>
    %c0_8 = arith.constant 0 : index
    %c0_9 = arith.constant 0 : index
    %28 = vector.load %arg3[%c0_8, %c0_9] : memref<2x1024xf32, #tpu.memory_space<vmem>>, vector<2x1024xf32>
    %29 = arith.mulf %28, %28 : vector<2x1024xf32>
    %cst_10 = arith.constant dense<0.000000e+00> : vector<2xf32>
    %30 = vector.multi_reduction <add>, %29, %cst_10 [1] : vector<2x1024xf32> to vector<2xf32>
    %31 = vector.shape_cast %30 : vector<2xf32> to vector<2x1xf32>
    %32 = math.sqrt %31 : vector<2x1xf32>
    %cst_11 = arith.constant 1.000000e-10 : f32
    %33 = vector.broadcast %cst_11 : f32 to vector<2x1xf32>
    %34 = arith.addf %32, %33 : vector<2x1xf32>
    %35 = tpu.reciprocal %34 {approx = true} : vector<2x1xf32> -> vector<2x1xf32>
    %36 = vector.broadcast %35 : vector<2x1xf32> to vector<2x1024xf32>
    %37 = arith.mulf %28, %36 : vector<2x1024xf32>
    %cst_12 = arith.constant 1.000000e+01 : f32
    %38 = vector.broadcast %cst_12 : f32 to vector<2x1024xf32>
    %39 = arith.mulf %38, %37 : vector<2x1024xf32>
    %40 = arith.addf %0, %39 : vector<2x1024xf32>
    %41 = arith.truncf %40 : vector<2x1024xf32> to vector<2x1024xbf16>
    %cst_13 = arith.constant dense<0.000000e+00> : vector<2x128xf32>
    %42 = tpu.matmul %41, %4, %cst_13 {dimension_numbers = #tpu.dot_dimension_numbers<[1], [0], [0], [1], [0, 0, 1, 1], [], []>} : vector<2x1024xbf16>, vector<1024x128xbf16>, vector<2x128xf32> -> vector<2x128xf32>
    %43 = vector.broadcast %2 : vector<1x128xf32> to vector<2x128xf32>
    %44 = arith.addf %42, %43 : vector<2x128xf32>
    %cst_14 = arith.constant -1.000000e+30 : f32
    %45 = vector.shape_cast %7 : vector<1x128xi1> to vector<1x128xi1>
    %46 = vector.broadcast %45 : vector<1x128xi1> to vector<2x128xi1>
    %47 = vector.broadcast %cst_14 : f32 to vector<2x128xf32>
    %48 = arith.select %46, %44, %47 : vector<2x128xi1>, vector<2x128xf32>
    %cst_15 = arith.constant dense<0xFF800000> : vector<2xf32>
    %49 = vector.multi_reduction <maximumf>, %48, %cst_15 [1] : vector<2x128xf32> to vector<2xf32>
    %50 = vector.shape_cast %49 : vector<2xf32> to vector<2x1xf32>
    %51 = vector.broadcast %50 : vector<2x1xf32> to vector<2x128xf32>
    %52 = arith.subf %48, %51 : vector<2x128xf32>
    %53 = math.exp %52 : vector<2x128xf32>
    %cst_16 = arith.constant dense<0.000000e+00> : vector<2xf32>
    %54 = vector.multi_reduction <add>, %53, %cst_16 [1] : vector<2x128xf32> to vector<2xf32>
    %55 = vector.shape_cast %54 : vector<2xf32> to vector<2x1xf32>
    %56 = tpu.reciprocal %55 {approx = true} : vector<2x1xf32> -> vector<2x1xf32>
    %57 = vector.broadcast %56 : vector<2x1xf32> to vector<2x128xf32>
    %58 = arith.mulf %53, %57 : vector<2x128xf32>
    %59 = arith.subf %58, %27 : vector<2x128xf32>
    %cst_17 = arith.constant 0.000000e+00 : f32
    %60 = vector.shape_cast %7 : vector<1x128xi1> to vector<1x128xi1>
    %61 = vector.broadcast %60 : vector<1x128xi1> to vector<2x128xi1>
    %62 = vector.broadcast %cst_17 : f32 to vector<2x128xf32>
    %63 = arith.select %61, %59, %62 : vector<2x128xi1>, vector<2x128xf32>
    %64 = arith.truncf %63 : vector<2x128xf32> to vector<2x128xbf16>
    %cst_18 = arith.constant dense<0.000000e+00> : vector<2x1024xf32>
    %65 = tpu.matmul %64, %4, %cst_18 {dimension_numbers = #tpu.dot_dimension_numbers<[1], [1], [0], [0], [0, 0, 1, 0], [], []>} : vector<2x128xbf16>, vector<1024x128xbf16>, vector<2x1024xf32> -> vector<2x1024xf32>
    %66 = arith.mulf %65, %65 : vector<2x1024xf32>
    %cst_19 = arith.constant dense<0.000000e+00> : vector<2xf32>
    %67 = vector.multi_reduction <add>, %66, %cst_19 [1] : vector<2x1024xf32> to vector<2xf32>
    %68 = vector.shape_cast %67 : vector<2xf32> to vector<2x1xf32>
    %69 = math.sqrt %68 : vector<2x1xf32>
    %cst_20 = arith.constant 1.000000e-10 : f32
    %70 = vector.broadcast %cst_20 : f32 to vector<2x1xf32>
    %71 = arith.addf %69, %70 : vector<2x1xf32>
    %72 = tpu.reciprocal %71 {approx = true} : vector<2x1xf32> -> vector<2x1xf32>
    %73 = vector.broadcast %72 : vector<2x1xf32> to vector<2x1024xf32>
    %74 = arith.mulf %65, %73 : vector<2x1024xf32>
    %cst_21 = arith.constant 1.000000e+01 : f32
    %75 = vector.broadcast %cst_21 : f32 to vector<2x1024xf32>
    %76 = arith.mulf %75, %74 : vector<2x1024xf32>
    %77 = arith.addf %0, %76 : vector<2x1024xf32>
    %78 = arith.truncf %77 : vector<2x1024xf32> to vector<2x1024xbf16>
    %cst_22 = arith.constant dense<0.000000e+00> : vector<2x128xf32>
    %79 = tpu.matmul %78, %4, %cst_22 {dimension_numbers = #tpu.dot_dimension_numbers<[1], [0], [0], [1], [0, 0, 1, 1], [], []>} : vector<2x1024xbf16>, vector<1024x128xbf16>, vector<2x128xf32> -> vector<2x128xf32>
    %80 = vector.broadcast %2 : vector<1x128xf32> to vector<2x128xf32>
    %81 = arith.addf %79, %80 : vector<2x128xf32>
    %cst_23 = arith.constant -1.000000e+30 : f32
    %82 = vector.shape_cast %7 : vector<1x128xi1> to vector<1x128xi1>
    %83 = vector.broadcast %82 : vector<1x128xi1> to vector<2x128xi1>
    %84 = vector.broadcast %cst_23 : f32 to vector<2x128xf32>
    %85 = arith.select %83, %81, %84 : vector<2x128xi1>, vector<2x128xf32>
    %cst_24 = arith.constant dense<0xFF800000> : vector<2xf32>
    %86 = vector.multi_reduction <maximumf>, %85, %cst_24 [1] : vector<2x128xf32> to vector<2xf32>
    %87 = vector.shape_cast %86 : vector<2xf32> to vector<2x1xf32>
    %88 = vector.broadcast %87 : vector<2x1xf32> to vector<2x128xf32>
    %89 = arith.subf %85, %88 : vector<2x128xf32>
    %90 = math.exp %89 : vector<2x128xf32>
    %cst_25 = arith.constant dense<0.000000e+00> : vector<2xf32>
    %91 = vector.multi_reduction <add>, %90, %cst_25 [1] : vector<2x128xf32> to vector<2xf32>
    %92 = vector.shape_cast %91 : vector<2xf32> to vector<2x1xf32>
    %93 = tpu.reciprocal %92 {approx = true} : vector<2x1xf32> -> vector<2x1xf32>
    %94 = vector.broadcast %93 : vector<2x1xf32> to vector<2x128xf32>
    %95 = arith.mulf %90, %94 : vector<2x128xf32>
    %96 = arith.subf %95, %27 : vector<2x128xf32>
    %cst_26 = arith.constant 0.000000e+00 : f32
    %97 = vector.shape_cast %7 : vector<1x128xi1> to vector<1x128xi1>
    %98 = vector.broadcast %97 : vector<1x128xi1> to vector<2x128xi1>
    %99 = vector.broadcast %cst_26 : f32 to vector<2x128xf32>
    %100 = arith.select %98, %96, %99 : vector<2x128xi1>, vector<2x128xf32>
    %101 = arith.truncf %100 : vector<2x128xf32> to vector<2x128xbf16>
    %cst_27 = arith.constant dense<0.000000e+00> : vector<2x1024xf32>
    %102 = tpu.matmul %101, %4, %cst_27 {dimension_numbers = #tpu.dot_dimension_numbers<[1], [1], [0], [0], [0, 0, 1, 0], [], []>} : vector<2x128xbf16>, vector<1024x128xbf16>, vector<2x1024xf32> -> vector<2x1024xf32>
    %103 = arith.mulf %102, %102 : vector<2x1024xf32>
    %cst_28 = arith.constant dense<0.000000e+00> : vector<2xf32>
    %104 = vector.multi_reduction <add>, %103, %cst_28 [1] : vector<2x1024xf32> to vector<2xf32>
    %105 = vector.shape_cast %104 : vector<2xf32> to vector<2x1xf32>
    %106 = math.sqrt %105 : vector<2x1xf32>
    %cst_29 = arith.constant 1.000000e-10 : f32
    %107 = vector.broadcast %cst_29 : f32 to vector<2x1xf32>
    %108 = arith.addf %106, %107 : vector<2x1xf32>
    %109 = tpu.reciprocal %108 {approx = true} : vector<2x1xf32> -> vector<2x1xf32>
    %110 = vector.broadcast %109 : vector<2x1xf32> to vector<2x1024xf32>
    %111 = arith.mulf %102, %110 : vector<2x1024xf32>
    %cst_30 = arith.constant 2.000000e+00 : f32
    %112 = vector.broadcast %cst_30 : f32 to vector<2x1024xf32>
    %113 = arith.mulf %112, %111 : vector<2x1024xf32>
    %114 = arith.addf %0, %113 : vector<2x1024xf32>
    %115 = arith.truncf %114 : vector<2x1024xf32> to vector<2x1024xbf16>
    %cst_31 = arith.constant dense<0.000000e+00> : vector<2x128xf32>
    %116 = tpu.matmul %115, %4, %cst_31 {dimension_numbers = #tpu.dot_dimension_numbers<[1], [0], [0], [1], [0, 0, 1, 1], [], []>} : vector<2x1024xbf16>, vector<1024x128xbf16>, vector<2x128xf32> -> vector<2x128xf32>
    %117 = vector.broadcast %2 : vector<1x128xf32> to vector<2x128xf32>
    %118 = arith.addf %116, %117 : vector<2x128xf32>
    %cst_32 = arith.constant -1.000000e+30 : f32
    %119 = vector.shape_cast %7 : vector<1x128xi1> to vector<1x128xi1>
    %120 = vector.broadcast %119 : vector<1x128xi1> to vector<2x128xi1>
    %121 = vector.broadcast %cst_32 : f32 to vector<2x128xf32>
    %122 = arith.select %120, %118, %121 : vector<2x128xi1>, vector<2x128xf32>
    %cst_33 = arith.constant dense<0xFF800000> : vector<2xf32>
    %123 = vector.multi_reduction <maximumf>, %122, %cst_33 [1] : vector<2x128xf32> to vector<2xf32>
    %124 = vector.shape_cast %123 : vector<2xf32> to vector<2x1xf32>
    %125 = vector.broadcast %124 : vector<2x1xf32> to vector<2x128xf32>
    %126 = arith.subf %122, %125 : vector<2x128xf32>
    %127 = math.exp %126 : vector<2x128xf32>
    %cst_34 = arith.constant dense<0.000000e+00> : vector<2xf32>
    %128 = vector.multi_reduction <add>, %127, %cst_34 [1] : vector<2x128xf32> to vector<2xf32>
    %129 = vector.shape_cast %128 : vector<2xf32> to vector<2x1xf32>
    %130 = math.log %129 : vector<2x1xf32>
    %131 = vector.broadcast %130 : vector<2x1xf32> to vector<2x128xf32>
    %132 = arith.subf %126, %131 : vector<2x128xf32>
    %133 = arith.subf %24, %132 : vector<2x128xf32>
    %134 = arith.mulf %27, %133 : vector<2x128xf32>
    %cst_35 = arith.constant 0.000000e+00 : f32
    %135 = vector.shape_cast %7 : vector<1x128xi1> to vector<1x128xi1>
    %136 = vector.broadcast %135 : vector<1x128xi1> to vector<2x128xi1>
    %137 = vector.broadcast %cst_35 : f32 to vector<2x128xf32>
    %138 = arith.select %136, %134, %137 : vector<2x128xi1>, vector<2x128xf32>
    %cst_36 = arith.constant dense<0.000000e+00> : vector<2xf32>
    %139 = vector.multi_reduction <add>, %138, %cst_36 [1] : vector<2x128xf32> to vector<2xf32>
    %140 = vector.shape_cast %139 : vector<2xf32> to vector<2x1xf32>
    %cst_37 = arith.constant dense<0.000000e+00> : vector<1xf32>
    %141 = vector.multi_reduction <add>, %140, %cst_37 [0] : vector<2x1xf32> to vector<1xf32>
    %142 = vector.shape_cast %141 : vector<1xf32> to vector<1x1xf32>
    %cst_38 = arith.constant 5.000000e-01 : f32
    %143 = vector.broadcast %cst_38 : f32 to vector<1x1xf32>
    %144 = arith.mulf %142, %143 : vector<1x1xf32>
    %c0_39 = arith.constant 0 : index
    %c0_40 = arith.constant 0 : index
    %145 = vector.load %arg4[%c0_39, %c0_40] : memref<1x1xf32, #tpu.memory_space<vmem>>, vector<1x1xf32>
    tpu.vector_store %arg4[%c0_39, %c0_40], %144 {strides = array<i32>} : memref<1x1xf32, #tpu.memory_space<vmem>>, vector<1x1xf32>,
    return
  }
}

</mosaic_0001>

<llo_original>
// kernel: tpu_custom_call.1
$region0: #{tpu_custom_call.1}
  #allocation0 [shape = 'u32[]', space=smem, size = 0x4, offset = 0x4, fixed_abs, tag = 'smem constant byte address 0x4 - core index']
  #allocation1 [shape = 'u32[144,128]{1,0:T(1,128)}', space=vmem, size = 0x12000, scoped, tag = 'internal scratch']
  %s0 = inlined_call_operand.hbm [shape: f32[2,1024], index: 0, kind: input, shape index: {}]
  %s1 = inlined_call_operand.hbm [shape: f32[1024,128], index: 1, kind: input, shape index: {}]
  %s2 = inlined_call_operand.vmem [shape: f32[1,128], index: 2, kind: input, shape index: {}]
  %s3 = inlined_call_operand.hbm [shape: f32[2,1024], index: 3, kind: input, shape index: {}]
  %s4 = inlined_call_operand.hbm [shape: f32[1,1], index: 4, kind: output, shape index: {}]
  %s5 = sld [smem:[#allocation0]]
  $region38: #{tpu_custom_call.1} parent=0
    _
  %s7 = ssub.s32 1, %s5
  %s8 = scalar_select 0, %s7, %s5
  $region1: #{tpu_custom_call.1} parent=0
    #allocation2 [shape = 'u8[8192]{0}', space=vmem, size = 0x2000, scoped, tag = 'input window, operand 0, single buffered']
    #allocation3 [shape = 's32[1]{0}', space=sflag, size = 0x4, scoped, tag = 'scoped memory for tpu_custom_call.1']
    #allocation4 [shape = 's32[1]{0}', space=sflag, size = 0x4, scoped, tag = 'scoped memory for tpu_custom_call.1']
    #allocation5 [shape = 'u8[524288]{0}', space=vmem, size = 0x80000, scoped, tag = 'input window, operand 1, single buffered']
    #allocation6 [shape = 's32[1]{0}', space=sflag, size = 0x4, scoped, tag = 'scoped memory for tpu_custom_call.1']
    #allocation7 [shape = 'u8[8192]{0}', space=vmem, size = 0x2000, scoped, tag = 'input window, operand 3, single buffered']
    #allocation8 [shape = 'u8[512]{0}', space=vmem, size = 0x400, scoped, tag = 'output window, operand 0, single buffered']
    %9 = vsyncpa [#allocation3], 0
    %10 = vsyncpa [#allocation6], 0
    %11 = vsyncpa [#allocation4], 0
    // Predicated region
    $region2: #{tpu_custom_call.1} parent=1 // pred_check
      _
    $region3: #{tpu_custom_call.1} parent=1 // pred_check_branch
      %13 = sbr.rel (0) target = $region5
    $region4: #{tpu_custom_call.1} parent=1 // pred_region
      %s15 = ssub.s32 256, 256
      %16 = vsyncadd [#allocation3], %s15
      %s18 = sshll.u32 [#allocation2], 4
      %s19 = int_to_ptr.vmem [resolvable:$true] %s18
      %21 = dma.hbm_to_vmem [thread:$0]  %s0, 256, %s19, [#allocation3]
    $region5: #{tpu_custom_call.1} parent=1 // pred_fallthru
      _
    // Predicated region
    $region6: #{tpu_custom_call.1} parent=1 // pred_check
      _
    $region7: #{tpu_custom_call.1} parent=1 // pred_check_branch
      %23 = sbr.rel (0) target = $region9
    $region8: #{tpu_custom_call.1} parent=1 // pred_region
      %s25 = ssub.s32 16384, 16384
      %26 = vsyncadd [#allocation6], %s25
      %s27 = sshll.u32 [#allocation5], 4
      %s28 = int_to_ptr.vmem [resolvable:$true] %s27
      %33 = dma.hbm_to_vmem [thread:$0]  %s1, 16384, %s28, [#allocation6], 128, 128, 8
    $region9: #{tpu_custom_call.1} parent=1 // pred_fallthru
      _
    // Predicated region
    $region10: #{tpu_custom_call.1} parent=1 // pred_check
      _
    $region11: #{tpu_custom_call.1} parent=1 // pred_check_branch
      %35 = sbr.rel (0) target = $region13
    $region12: #{tpu_custom_call.1} parent=1 // pred_region
      _
    $region13: #{tpu_custom_call.1} parent=1 // pred_fallthru
      _
    // Predicated region
    $region14: #{tpu_custom_call.1} parent=1 // pred_check
      _
    $region15: #{tpu_custom_call.1} parent=1 // pred_check_branch
      %37 = sbr.rel (0) target = $region17
    $region16: #{tpu_custom_call.1} parent=1 // pred_region
      %s39 = ssub.s32 256, 256
      %40 = vsyncadd [#allocation6], %s39
      %s42 = sshll.u32 [#allocation7], 4
      %s43 = int_to_ptr.vmem [resolvable:$true] %s42
      %45 = dma.hbm_to_vmem [thread:$0]  %s3, 256, %s43, [#allocation6]
    $region17: #{tpu_custom_call.1} parent=1 // pred_fallthru
      _
    // Predicated region
    $region18: #{tpu_custom_call.1} parent=1 // pred_check
      _
    $region19: #{tpu_custom_call.1} parent=1 // pred_check_branch
      %47 = sbr.rel (0) target = $region21
    $region20: #{tpu_custom_call.1} parent=1 // pred_region
      %48 = dma.done [#allocation3], 256
    $region21: #{tpu_custom_call.1} parent=1 // pred_fallthru
      _
    // Predicated region
    $region22: #{tpu_custom_call.1} parent=1 // pred_check
      _
    $region23: #{tpu_custom_call.1} parent=1 // pred_check_branch
      %50 = sbr.rel (0) target = $region25
    $region24: #{tpu_custom_call.1} parent=1 // pred_region
      %51 = dma.done [#allocation6], 16384
    $region25: #{tpu_custom_call.1} parent=1 // pred_fallthru
      _
    // Predicated region
    $region26: #{tpu_custom_call.1} parent=1 // pred_check
      _
    $region27: #{tpu_custom_call.1} parent=1 // pred_check_branch
      %53 = sbr.rel (0) target = $region29
    $region28: #{tpu_custom_call.1} parent=1 // pred_region
      %54 = dma.done [#allocation6], 256
    $region29: #{tpu_custom_call.1} parent=1 // pred_fallthru
      _
    %v56 = vld [vmem:[#allocation2] sm:$0xff]
    %v57 = vld [vmem:[#allocation2 + $0x8] sm:$0xff]
    %v58 = vld [vmem:[#allocation5] sm:$0xff]
    %v59 = vld [vmem:[#allocation5 + $0x8] sm:$0xff]
    %v60 = vld [vmem:[#allocation5 + $0x10] sm:$0xff]
    %v61 = vld [vmem:[#allocation5 + $0x18] sm:$0xff]
    %v62 = vld [vmem:[#allocation5 + $0x20] sm:$0xff]
    %v63 = vld [vmem:[#allocation5 + $0x28] sm:$0xff]
    %v64 = vld [vmem:[#allocation5 + $0x30] sm:$0xff]
    %v65 = vld [vmem:[#allocation5 + $0x38] sm:$0xff]
    %v66 = vld [vmem:[#allocation5 + $0x40] sm:$0xff]
    %v67 = vld [vmem:[#allocation5 + $0x48] sm:$0xff]
    %v68 = vld [vmem:[#allocation5 + $0x50] sm:$0xff]
    %v69 = vld [vmem:[#allocation5 + $0x58] sm:$0xff]
    %v70 = vld [vmem:[#allocation5 + $0x60] sm:$0xff]
    %v71 = vld [vmem:[#allocation5 + $0x68] sm:$0xff]
    %v72 = vld [vmem:[#allocation5 + $0x70] sm:$0xff]
    %v73 = vld [vmem:[#allocation5 + $0x78] sm:$0xff]
    %v74 = vld [vmem:[#allocation5 + $0x80] sm:$0xff]
    %v75 = vld [vmem:[#allocation5 + $0x88] sm:$0xff]
    %v76 = vld [vmem:[#allocation5 + $0x90] sm:$0xff]
    %v77 = vld [vmem:[#allocation5 + $0x98] sm:$0xff]
    %v78 = vld [vmem:[#allocation5 + $0xa0] sm:$0xff]
    %v79 = vld [vmem:[#allocation5 + $0xa8] sm:$0xff]
    %v80 = vld [vmem:[#allocation5 + $0xb0] sm:$0xff]
    %v81 = vld [vmem:[#allocation5 + $0xb8] sm:$0xff]
    %v82 = vld [vmem:[#allocation5 + $0xc0] sm:$0xff]
    %v83 = vld [vmem:[#allocation5 + $0xc8] sm:$0xff]
    %v84 = vld [vmem:[#allocation5 + $0xd0] sm:$0xff]
    %v85 = vld [vmem:[#allocation5 + $0xd8] sm:$0xff]
    %v86 = vld [vmem:[#allocation5 + $0xe0] sm:$0xff]
    %v87 = vld [vmem:[#allocation5 + $0xe8] sm:$0xff]
    %v88 = vld [vmem:[#allocation5 + $0xf0] sm:$0xff]
    %v89 = vld [vmem:[#allocation5 + $0xf8] sm:$0xff]
    %v90 = vld [vmem:[#allocation5 + $0x100] sm:$0xff]
    %v91 = vld [vmem:[#allocation5 + $0x108] sm:$0xff]
    %v92 = vld [vmem:[#allocation5 + $0x110] sm:$0xff]
    %v93 = vld [vmem:[#allocation5 + $0x118] sm:$0xff]
    %v94 = vld [vmem:[#allocation5 + $0x120] sm:$0xff]
    %v95 = vld [vmem:[#allocation5 + $0x128] sm:$0xff]
    %v96 = vld [vmem:[#allocation5 + $0x130] sm:$0xff]
    %v97 = vld [vmem:[#allocation5 + $0x138] sm:$0xff]
    %v98 = vld [vmem:[#allocation5 + $0x140] sm:$0xff]
    %v99 = vld [vmem:[#allocation5 + $0x148] sm:$0xff]
    %v100 = vld [vmem:[#allocation5 + $0x150] sm:$0xff]
    %v101 = vld [vmem:[#allocation5 + $0x158] sm:$0xff]
    %v102 = vld [vmem:[#allocation5 + $0x160] sm:$0xff]
    %v103 = vld [vmem:[#allocation5 + $0x168] sm:$0xff]
    %v104 = vld [vmem:[#allocation5 + $0x170] sm:$0xff]
    %v105 = vld [vmem:[#allocation5 + $0x178] sm:$0xff]
    %v106 = vld [vmem:[#allocation5 + $0x180] sm:$0xff]
    %v107 = vld [vmem:[#allocation5 + $0x188] sm:$0xff]
    %v108 = vld [vmem:[#allocation5 + $0x190] sm:$0xff]
    %v109 = vld [vmem:[#allocation5 + $0x198] sm:$0xff]
    %v110 = vld [vmem:[#allocation5 + $0x1a0] sm:$0xff]
    %v111 = vld [vmem:[#allocation5 + $0x1a8] sm:$0xff]
    %v112 = vld [vmem:[#allocation5 + $0x1b0] sm:$0xff]
    %v113 = vld [vmem:[#allocation5 + $0x1b8] sm:$0xff]
    %v114 = vld [vmem:[#allocation5 + $0x1c0] sm:$0xff]
    %v115 = vld [vmem:[#allocation5 + $0x1c8] sm:$0xff]
    %v116 = vld [vmem:[#allocation5 + $0x1d0] sm:$0xff]
    %v117 = vld [vmem:[#allocation5 + $0x1d8] sm:$0xff]
    %v118 = vld [vmem:[#allocation5 + $0x1e0] sm:$0xff]
    %v119 = vld [vmem:[#allocation5 + $0x1e8] sm:$0xff]
    %v120 = vld [vmem:[#allocation5 + $0x1f0] sm:$0xff]
    %v121 = vld [vmem:[#allocation5 + $0x1f8] sm:$0xff]
    %v122 = vld [vmem:[#allocation5 + $0x200] sm:$0xff]
    %v123 = vld [vmem:[#allocation5 + $0x208] sm:$0xff]
    %v124 = vld [vmem:[#allocation5 + $0x210] sm:$0xff]
    %v125 = vld [vmem:[#allocation5 + $0x218] sm:$0xff]
    %v126 = vld [vmem:[#allocation5 + $0x220] sm:$0xff]
    %v127 = vld [vmem:[#allocation5 + $0x228] sm:$0xff]
    %v128 = vld [vmem:[#allocation5 + $0x230] sm:$0xff]
    %v129 = vld [vmem:[#allocation5 + $0x238] sm:$0xff]
    %v130 = vld [vmem:[#allocation5 + $0x240] sm:$0xff]
    %v131 = vld [vmem:[#allocation5 + $0x248] sm:$0xff]
    %v132 = vld [vmem:[#allocation5 + $0x250] sm:$0xff]
    %v133 = vld [vmem:[#allocation5 + $0x258] sm:$0xff]
    %v134 = vld [vmem:[#allocation5 + $0x260] sm:$0xff]
    %v135 = vld [vmem:[#allocation5 + $0x268] sm:$0xff]
    %v136 = vld [vmem:[#allocation5 + $0x270] sm:$0xff]
    %v137 = vld [vmem:[#allocation5 + $0x278] sm:$0xff]
    %v138 = vld [vmem:[#allocation5 + $0x280] sm:$0xff]
    %v139 = vld [vmem:[#allocation5 + $0x288] sm:$0xff]
    %v140 = vld [vmem:[#allocation5 + $0x290] sm:$0xff]
    %v141 = vld [vmem:[#allocation5 + $0x298] sm:$0xff]
    %v142 = vld [vmem:[#allocation5 + $0x2a0] sm:$0xff]
    %v143 = vld [vmem:[#allocation5 + $0x2a8] sm:$0xff]
    %v144 = vld [vmem:[#allocation5 + $0x2b0] sm:$0xff]
    %v145 = vld [vmem:[#allocation5 + $0x2b8] sm:$0xff]
    %v146 = vld [vmem:[#allocation5 + $0x2c0] sm:$0xff]
    %v147 = vld [vmem:[#allocation5 + $0x2c8] sm:$0xff]
    %v148 = vld [vmem:[#allocation5 + $0x2d0] sm:$0xff]
    %v149 = vld [vmem:[#allocation5 + $0x2d8] sm:$0xff]
    %v150 = vld [vmem:[#allocation5 + $0x2e0] sm:$0xff]
    %v151 = vld [vmem:[#allocation5 + $0x2e8] sm:$0xff]
    %v152 = vld [vmem:[#allocation5 + $0x2f0] sm:$0xff]
    %v153 = vld [vmem:[#allocation5 + $0x2f8] sm:$0xff]
    %v154 = vld [vmem:[#allocation5 + $0x300] sm:$0xff]
    %v155 = vld [vmem:[#allocation5 + $0x308] sm:$0xff]
    %v156 = vld [vmem:[#allocation5 + $0x310] sm:$0xff]
    %v157 = vld [vmem:[#allocation5 + $0x318] sm:$0xff]
    %v158 = vld [vmem:[#allocation5 + $0x320] sm:$0xff]
    %v159 = vld [vmem:[#allocation5 + $0x328] sm:$0xff]
    %v160 = vld [vmem:[#allocation5 + $0x330] sm:$0xff]
    %v161 = vld [vmem:[#allocation5 + $0x338] sm:$0xff]
    %v162 = vld [vmem:[#allocation5 + $0x340] sm:$0xff]
    %v163 = vld [vmem:[#allocation5 + $0x348] sm:$0xff]
    %v164 = vld [vmem:[#allocation5 + $0x350] sm:$0xff]
    %v165 = vld [vmem:[#allocation5 + $0x358] sm:$0xff]
    %v166 = vld [vmem:[#allocation5 + $0x360] sm:$0xff]
    %v167 = vld [vmem:[#allocation5 + $0x368] sm:$0xff]
    %v168 = vld [vmem:[#allocation5 + $0x370] sm:$0xff]
    %v169 = vld [vmem:[#allocation5 + $0x378] sm:$0xff]
    %v170 = vld [vmem:[#allocation5 + $0x380] sm:$0xff]
    %v171 = vld [vmem:[#allocation5 + $0x388] sm:$0xff]
    %v172 = vld [vmem:[#allocation5 + $0x390] sm:$0xff]
    %v173 = vld [vmem:[#allocation5 + $0x398] sm:$0xff]
    %v174 = vld [vmem:[#allocation5 + $0x3a0] sm:$0xff]
    %v175 = vld [vmem:[#allocation5 + $0x3a8] sm:$0xff]
    %v176 = vld [vmem:[#allocation5 + $0x3b0] sm:$0xff]
    %v177 = vld [vmem:[#allocation5 + $0x3b8] sm:$0xff]
    %v178 = vld [vmem:[#allocation5 + $0x3c0] sm:$0xff]
    %v179 = vld [vmem:[#allocation5 + $0x3c8] sm:$0xff]
    %v180 = vld [vmem:[#allocation5 + $0x3d0] sm:$0xff]
    %v181 = vld [vmem:[#allocation5 + $0x3d8] sm:$0xff]
    %v182 = vld [vmem:[#allocation5 + $0x3e0] sm:$0xff]
    %v183 = vld [vmem:[#allocation5 + $0x3e8] sm:$0xff]
    %v184 = vld [vmem:[#allocation5 + $0x3f0] sm:$0xff]
    %v185 = vld [vmem:[#allocation5 + $0x3f8] sm:$0xff]
    %v186 = vld [vmem:[%s2] sm:$0x1]
    %v189 = vcombine.high %v56, %v56
    %v191 = vunpack.c.l.s4 1983009808
    %v192 = vunpack.c.0.s8 %v191
    %v193 = vlaneseq
    %v194 = vshrl.u32 %v193, 7
    %v195 = vsub.s32 %v192, %v194
    %v196 = vrot.slane %v56, %v195
    %v198 = vunpack.c.l.s4 1983009808
    %v199 = vunpack.c.0.s8 %v198
    %v200 = vlaneseq
    %v201 = vshrl.u32 %v200, 7
    %v202 = vsub.s32 %v199, %v201
    %v203 = vrot.slane %v189, %v202
    %v204 = vcombine.high %v196, %v196
    %v205 = vcombine.high %v203, %v203
    %v206 = vcombine.high %v57, %v57
    %v208 = vunpack.c.l.s4 1983009808
    %v209 = vunpack.c.0.s8 %v208
    %v210 = vlaneseq
    %v211 = vshrl.u32 %v210, 7
    %v212 = vsub.s32 %v209, %v211
    %v213 = vrot.slane %v57, %v212
    %v215 = vunpack.c.l.s4 1983009808
    %v216 = vunpack.c.0.s8 %v215
    %v217 = vlaneseq
    %v218 = vshrl.u32 %v217, 7
    %v219 = vsub.s32 %v216, %v218
    %v220 = vrot.slane %v206, %v219
    %v221 = vcombine.high %v213, %v213
    %v222 = vcombine.high %v220, %v220
    %v231 = vpack.c.bf16 %v196, %v196
    %v232 = vpack.c.bf16 %v204, %v204
    %v233 = vpack.c.bf16 %v203, %v203
    %v234 = vpack.c.bf16 %v205, %v205
    %v235 = vpack.c.bf16 %v213, %v213
    %v236 = vpack.c.bf16 %v221, %v221
    %v237 = vpack.c.bf16 %v220, %v220
    %v238 = vpack.c.bf16 %v222, %v222
    %v239 = vpack.c.bf16 %v59, %v58
    %v240 = vpack.c.bf16 %v61, %v60
    %v241 = vpack.c.bf16 %v63, %v62
    %v242 = vpack.c.bf16 %v65, %v64
    %v243 = vpack.c.bf16 %v67, %v66
    %v244 = vpack.c.bf16 %v69, %v68
    %v245 = vpack.c.bf16 %v71, %v70
    %v246 = vpack.c.bf16 %v73, %v72
    %v247 = vpack.c.bf16 %v75, %v74
    %v248 = vpack.c.bf16 %v77, %v76
    %v249 = vpack.c.bf16 %v79, %v78
    %v250 = vpack.c.bf16 %v81, %v80
    %v251 = vpack.c.bf16 %v83, %v82
    %v252 = vpack.c.bf16 %v85, %v84
    %v253 = vpack.c.bf16 %v87, %v86
    %v254 = vpack.c.bf16 %v89, %v88
    %v255 = vpack.c.bf16 %v91, %v90
    %v256 = vpack.c.bf16 %v93, %v92
    %v257 = vpack.c.bf16 %v95, %v94
    %v258 = vpack.c.bf16 %v97, %v96
    %v259 = vpack.c.bf16 %v99, %v98
    %v260 = vpack.c.bf16 %v101, %v100
    %v261 = vpack.c.bf16 %v103, %v102
    %v262 = vpack.c.bf16 %v105, %v104
    %v263 = vpack.c.bf16 %v107, %v106
    %v264 = vpack.c.bf16 %v109, %v108
    %v265 = vpack.c.bf16 %v111, %v110
    %v266 = vpack.c.bf16 %v113, %v112
    %v267 = vpack.c.bf16 %v115, %v114
    %v268 = vpack.c.bf16 %v117, %v116
    %v269 = vpack.c.bf16 %v119, %v118
    %v270 = vpack.c.bf16 %v121, %v120
    %v271 = vpack.c.bf16 %v123, %v122
    %v272 = vpack.c.bf16 %v125, %v124
    %v273 = vpack.c.bf16 %v127, %v126
    %v274 = vpack.c.bf16 %v129, %v128
    %v275 = vpack.c.bf16 %v131, %v130
    %v276 = vpack.c.bf16 %v133, %v132
    %v277 = vpack.c.bf16 %v135, %v134
    %v278 = vpack.c.bf16 %v137, %v136
    %v279 = vpack.c.bf16 %v139, %v138
    %v280 = vpack.c.bf16 %v141, %v140
    %v281 = vpack.c.bf16 %v143, %v142
    %v282 = vpack.c.bf16 %v145, %v144
    %v283 = vpack.c.bf16 %v147, %v146
    %v284 = vpack.c.bf16 %v149, %v148
    %v285 = vpack.c.bf16 %v151, %v150
    %v286 = vpack.c.bf16 %v153, %v152
    %v287 = vpack.c.bf16 %v155, %v154
    %v288 = vpack.c.bf16 %v157, %v156
    %v289 = vpack.c.bf16 %v159, %v158
    %v290 = vpack.c.bf16 %v161, %v160
    %v291 = vpack.c.bf16 %v163, %v162
    %v292 = vpack.c.bf16 %v165, %v164
    %v293 = vpack.c.bf16 %v167, %v166
    %v294 = vpack.c.bf16 %v169, %v168
    %v295 = vpack.c.bf16 %v171, %v170
    %v296 = vpack.c.bf16 %v173, %v172
    %v297 = vpack.c.bf16 %v175, %v174
    %v298 = vpack.c.bf16 %v177, %v176
    %v299 = vpack.c.bf16 %v179, %v178
    %v300 = vpack.c.bf16 %v181, %v180
    %v301 = vpack.c.bf16 %v183, %v182
    %v302 = vpack.c.bf16 %v185, %v184
    %v303 = vlaneseq
    %v304 = vand.u32 %v303, 127
    %vm305 = vcmp.lt.s32.totalorder %v304, 10
    %v307 = vlaneseq
    %v308 = vshrl.u32 %v307, 7
    %v309 = vsub.s32 0, %v308
    %v310 = vrot.slane %v186, %v309
    %312 = vmatprep.subr.bf16.mxu0 0
    %313 = vmatpush1.bf16.msra.mxu0 %v239
    %314 = vmatprep.subr.bf16.mxu0 0
    %315 = vmatpush1.bf16.msra.mxu0 %v240
    %316 = vmatprep.subr.bf16.mxu0 0
    %317 = vmatpush1.bf16.msra.mxu0 %v241
    %318 = vmatprep.subr.bf16.mxu0 0
    %319 = vmatpush1.bf16.msra.mxu0 %v242
    %320 = vmatprep.subr.bf16.mxu0 0
    %321 = vmatpush1.bf16.msra.mxu0 %v243
    %322 = vmatprep.subr.bf16.mxu0 0
    %323 = vmatpush1.bf16.msra.mxu0 %v244
    %324 = vmatprep.subr.bf16.mxu0 0
    %325 = vmatpush1.bf16.msra.mxu0 %v245
    %326 = vmatprep.subr.bf16.mxu0 0
    %327 = vmatpush1.bf16.msra.mxu0 %v246
    %328 = vmatprep.subr.bf16.mxu0 0
    %329 = vmatpush1.bf16.msra.mxu0 %v247
    %330 = vmatprep.subr.bf16.mxu0 0
    %331 = vmatpush1.bf16.msra.mxu0 %v248
    %332 = vmatprep.subr.bf16.mxu0 0
    %333 = vmatpush1.bf16.msra.mxu0 %v249
    %334 = vmatprep.subr.bf16.mxu0 0
    %335 = vmatpush1.bf16.msra.mxu0 %v250
    %336 = vmatprep.subr.bf16.mxu0 0
    %337 = vmatpush1.bf16.msra.mxu0 %v251
    %338 = vmatprep.subr.bf16.mxu0 0
    %339 = vmatpush1.bf16.msra.mxu0 %v252
    %340 = vmatprep.subr.bf16.mxu0 0
    %341 = vmatpush1.bf16.msra.mxu0 %v253
    %342 = vmatprep.subr.bf16.mxu0 0
    %343 = vmatpush1.bf16.msra.mxu0 %v254
    %344 = vmatprep.mubr.bf16.mxu0 %v232
    %345 = vmatmul.mubr.bf16.gmra.mrb[0].mxu0 %v231
    %v346 = vpop.f32.mrb[0].mxu0
    %v347 = vadd.f32 %v310, %v346
    %v348 = vpop.f32.mrb[0].mxu0
    %v349 = vpop.f32.mrb[0].mxu0
    %v350 = vpop.f32.mrb[0].mxu0
    %351 = vdwg.mxu0
    %352 = vmatprep.subr.bf16.mxu0 0
    %353 = vmatpush1.bf16.msra.mxu0 %v255
    %354 = vmatprep.subr.bf16.mxu0 0
    %355 = vmatpush1.bf16.msra.mxu0 %v256
    %356 = vmatprep.subr.bf16.mxu0 0
    %357 = vmatpush1.bf16.msra.mxu0 %v257
    %358 = vmatprep.subr.bf16.mxu0 0
    %359 = vmatpush1.bf16.msra.mxu0 %v258
    %360 = vmatprep.subr.bf16.mxu0 0
    %361 = vmatpush1.bf16.msra.mxu0 %v259
    %362 = vmatprep.subr.bf16.mxu0 0
    %363 = vmatpush1.bf16.msra.mxu0 %v260
    %364 = vmatprep.subr.bf16.mxu0 0
    %365 = vmatpush1.bf16.msra.mxu0 %v261
    %366 = vmatprep.subr.bf16.mxu0 0
    %367 = vmatpush1.bf16.msra.mxu0 %v262
    %368 = vmatprep.subr.bf16.mxu0 0
    %369 = vmatpush1.bf16.msra.mxu0 %v263
    %370 = vmatprep.subr.bf16.mxu0 0
    %371 = vmatpush1.bf16.msra.mxu0 %v264
    %372 = vmatprep.subr.bf16.mxu0 0
    %373 = vmatpush1.bf16.msra.mxu0 %v265
    %374 = vmatprep.subr.bf16.mxu0 0
    %375 = vmatpush1.bf16.msra.mxu0 %v266
    %376 = vmatprep.subr.bf16.mxu0 0
    %377 = vmatpush1.bf16.msra.mxu0 %v267
    %378 = vmatprep.subr.bf16.mxu0 0
    %379 = vmatpush1.bf16.msra.mxu0 %v268
    %380 = vmatprep.subr.bf16.mxu0 0
    %381 = vmatpush1.bf16.msra.mxu0 %v269
    %382 = vmatprep.subr.bf16.mxu0 0
    %383 = vmatpush1.bf16.msra.mxu0 %v270
    %384 = vmatprep.mubr.bf16.mxu0 %v234
    %385 = vmatmul.mubr.bf16.gmra.mrb[0].mxu0 %v233
    %v386 = vpop.f32.mrb[0].mxu0
    %v387 = vadd.f32 %v347, %v386
    %v388 = vpop.f32.mrb[0].mxu0
    %v389 = vpop.f32.mrb[0].mxu0
    %v390 = vpop.f32.mrb[0].mxu0
    %391 = vdwg.mxu0
    %392 = vmatprep.subr.bf16.mxu0 0
    %393 = vmatpush1.bf16.msra.mxu0 %v271
    %394 = vmatprep.subr.bf16.mxu0 0
    %395 = vmatpush1.bf16.msra.mxu0 %v272
    %396 = vmatprep.subr.bf16.mxu0 0
    %397 = vmatpush1.bf16.msra.mxu0 %v273
    %398 = vmatprep.subr.bf16.mxu0 0
    %399 = vmatpush1.bf16.msra.mxu0 %v274
    %400 = vmatprep.subr.bf16.mxu0 0
    %401 = vmatpush1.bf16.msra.mxu0 %v275
    %402 = vmatprep.subr.bf16.mxu0 0
    %403 = vmatpush1.bf16.msra.mxu0 %v276
    %404 = vmatprep.subr.bf16.mxu0 0
    %405 = vmatpush1.bf16.msra.mxu0 %v277
    %406 = vmatprep.subr.bf16.mxu0 0
    %407 = vmatpush1.bf16.msra.mxu0 %v278
    %408 = vmatprep.subr.bf16.mxu0 0
    %409 = vmatpush1.bf16.msra.mxu0 %v279
    %410 = vmatprep.subr.bf16.mxu0 0
    %411 = vmatpush1.bf16.msra.mxu0 %v280
    %412 = vmatprep.subr.bf16.mxu0 0
    %413 = vmatpush1.bf16.msra.mxu0 %v281
    %414 = vmatprep.subr.bf16.mxu0 0
    %415 = vmatpush1.bf16.msra.mxu0 %v282
    %416 = vmatprep.subr.bf16.mxu0 0
    %417 = vmatpush1.bf16.msra.mxu0 %v283
    %418 = vmatprep.subr.bf16.mxu0 0
    %419 = vmatpush1.bf16.msra.mxu0 %v284
    %420 = vmatprep.subr.bf16.mxu0 0
    %421 = vmatpush1.bf16.msra.mxu0 %v285
    %422 = vmatprep.subr.bf16.mxu0 0
    %423 = vmatpush1.bf16.msra.mxu0 %v286
    %424 = vmatprep.mubr.bf16.mxu0 %v236
    %425 = vmatmul.mubr.bf16.gmra.mrb[0].mxu0 %v235
    %v426 = vpop.f32.mrb[0].mxu0
    %v427 = vadd.f32 %v387, %v426
    %v428 = vpop.f32.mrb[0].mxu0
    %v429 = vpop.f32.mrb[0].mxu0
    %v430 = vpop.f32.mrb[0].mxu0
    %431 = vdwg.mxu0
    %432 = vmatprep.subr.bf16.mxu0 0
    %433 = vmatpush1.bf16.msra.mxu0 %v287
    %434 = vmatprep.subr.bf16.mxu0 0
    %435 = vmatpush1.bf16.msra.mxu0 %v288
    %436 = vmatprep.subr.bf16.mxu0 0
    %437 = vmatpush1.bf16.msra.mxu0 %v289
    %438 = vmatprep.subr.bf16.mxu0 0
    %439 = vmatpush1.bf16.msra.mxu0 %v290
    %440 = vmatprep.subr.bf16.mxu0 0
    %441 = vmatpush1.bf16.msra.mxu0 %v291
    %442 = vmatprep.subr.bf16.mxu0 0
    %443 = vmatpush1.bf16.msra.mxu0 %v292
    %444 = vmatprep.subr.bf16.mxu0 0
    %445 = vmatpush1.bf16.msra.mxu0 %v293
    %446 = vmatprep.subr.bf16.mxu0 0
    %447 = vmatpush1.bf16.msra.mxu0 %v294
    %448 = vmatprep.subr.bf16.mxu0 0
    %449 = vmatpush1.bf16.msra.mxu0 %v295
    %450 = vmatprep.subr.bf16.mxu0 0
    %451 = vmatpush1.bf16.msra.mxu0 %v296
    %452 = vmatprep.subr.bf16.mxu0 0
    %453 = vmatpush1.bf16.msra.mxu0 %v297
    %454 = vmatprep.subr.bf16.mxu0 0
    %455 = vmatpush1.bf16.msra.mxu0 %v298
    %456 = vmatprep.subr.bf16.mxu0 0
    %457 = vmatpush1.bf16.msra.mxu0 %v299
    %458 = vmatprep.subr.bf16.mxu0 0
    %459 = vmatpush1.bf16.msra.mxu0 %v300
    %460 = vmatprep.subr.bf16.mxu0 0
    %461 = vmatpush1.bf16.msra.mxu0 %v301
    %462 = vmatprep.subr.bf16.mxu0 0
    %463 = vmatpush1.bf16.msra.mxu0 %v302
    %464 = vmatprep.mubr.bf16.mxu0 %v238
    %465 = vmatmul.mubr.bf16.gmra.mrb[0].mxu0 %v237
    %v466 = vpop.f32.mrb[0].mxu0
    %v467 = vadd.f32 %v427, %v466
    %v468 = vpop.f32.mrb[0].mxu0
    %v469 = vpop.f32.mrb[0].mxu0
    %v470 = vpop.f32.mrb[0].mxu0
    %471 = vdwg.mxu0
    %v472 = vsel %vm305, 1, 0
    %vm473 = vcmp.eq.s32.totalorder %v472, 1
    %v474 = vsel %vm473, %v467, -1e+30
    %vm475 = vcmask 1041408
    %v476 = vsel %vm475, %v474, -inf
    %477 = vmax.xlane.f32.xlu0 %v476
    %v478 = vpop.xlane.xlu0 %477
    %v479 = vsub.f32 %v474, %v478
    %v480 = vmul.f32 %v479, 1.442695
    %v481 = vpow.pop %v480
    %v482 = vsel %vm475, %v481, 0.0
    %483 = vadd.xlane.f32.xlu0 %v482
    %v484 = vpop.xlane.xlu0 %483
    %v485 = vlog2.pop %v484
    %v486 = vmul.f32 %v485, 0.6931472
    %v487 = vsub.f32 %v479, %v486
    %v488 = vrcp.pop %v484
    %v489 = vmul.f32 %v481, %v488
    %v490 = vld [vmem:[#allocation7] sm:$0xff]
    %v491 = vld [vmem:[#allocation7 + $0x8] sm:$0xff]
    %v492 = vmul.f32 %v490, %v490
    %v493 = vmul.f32 %v491, %v491
    %v496 = vcombine.high %v492, %v492
    %v498 = vunpack.c.l.s4 1983009808
    %v499 = vunpack.c.0.s8 %v498
    %v500 = vlaneseq
    %v501 = vshrl.u32 %v500, 7
    %v502 = vsub.s32 %v499, %v501
    %v503 = vrot.slane %v492, %v502
    %v505 = vunpack.c.l.s4 1983009808
    %v506 = vunpack.c.0.s8 %v505
    %v507 = vlaneseq
    %v508 = vshrl.u32 %v507, 7
    %v509 = vsub.s32 %v506, %v508
    %v510 = vrot.slane %v496, %v509
    %v511 = vcombine.high %v503, %v503
    %v512 = vcombine.high %v510, %v510
    %v513 = vcombine.high %v493, %v493
    %v515 = vunpack.c.l.s4 1983009808
    %v516 = vunpack.c.0.s8 %v515
    %v517 = vlaneseq
    %v518 = vshrl.u32 %v517, 7
    %v519 = vsub.s32 %v516, %v518
    %v520 = vrot.slane %v493, %v519
    %v522 = vunpack.c.l.s4 1983009808
    %v523 = vunpack.c.0.s8 %v522
    %v524 = vlaneseq
    %v525 = vshrl.u32 %v524, 7
    %v526 = vsub.s32 %v523, %v525
    %v527 = vrot.slane %v513, %v526
    %v528 = vcombine.high %v520, %v520
    %v529 = vcombine.high %v527, %v527
    %v538 = vsel %vm475, %v503, 0.0
    %v539 = vsel %vm475, %v511, 0.0
    %v540 = vadd.f32 %v538, %v539
    %v541 = vsel %vm475, %v510, 0.0
    %v542 = vadd.f32 %v540, %v541
    %v543 = vsel %vm475, %v512, 0.0
    %v544 = vadd.f32 %v542, %v543
    %v545 = vsel %vm475, %v520, 0.0
    %v546 = vadd.f32 %v544, %v545
    %v547 = vsel %vm475, %v528, 0.0
    %v548 = vadd.f32 %v546, %v547
    %v549 = vsel %vm475, %v527, 0.0
    %v550 = vadd.f32 %v548, %v549
    %v551 = vsel %vm475, %v529, 0.0
    %v552 = vadd.f32 %v550, %v551
    %553 = vadd.xlane.f32.xlu0 %v552
    %v554 = vpop.xlane.xlu0 %553
    %v555 = vrsqrt.pop %v554
    %v556 = vmul.f32 %v554, %v555
    %vm557 = vcmp.eq.f32.partialorder %v554, inf
    %v558 = vsel %vm557, %v554, %v556
    %vm559 = vcmp.eq.f32.partialorder %v554, 0.0
    %v560 = vand.u32 %v554, 2147483648
    %v561 = vsel %vm559, %v560, %v558
    %v562 = vadd.f32 %v561, 1e-10
    %v563 = vrcp.pop %v562
    %v566 = vunpack.c.l.s4 269488144
    %v567 = vunpack.c.0.s8 %v566
    %v568 = vlaneseq
    %v569 = vshrl.u32 %v568, 7
    %v570 = vsub.s32 %v567, %v569
    %v571 = vrot.slane %v563, %v570
    %v573 = vmul.f32 %v490, %v571
    %v574 = vmul.f32 %v491, %v571
    %v575 = vmul.f32 %v573, 10.0
    %v576 = vmul.f32 %v574, 10.0
    %v577 = vadd.f32 %v56, %v575
    %v578 = vadd.f32 %v57, %v576
    %v581 = vcombine.high %v577, %v577
    %v583 = vunpack.c.l.s4 1983009808
    %v584 = vunpack.c.0.s8 %v583
    %v585 = vlaneseq
    %v586 = vshrl.u32 %v585, 7
    %v587 = vsub.s32 %v584, %v586
    %v588 = vrot.slane %v577, %v587
    %v590 = vunpack.c.l.s4 1983009808
    %v591 = vunpack.c.0.s8 %v590
    %v592 = vlaneseq
    %v593 = vshrl.u32 %v592, 7
    %v594 = vsub.s32 %v591, %v593
    %v595 = vrot.slane %v581, %v594
    %v596 = vcombine.high %v588, %v588
    %v597 = vcombine.high %v595, %v595
    %v598 = vcombine.high %v578, %v578
    %v600 = vunpack.c.l.s4 1983009808
    %v601 = vunpack.c.0.s8 %v600
    %v602 = vlaneseq
    %v603 = vshrl.u32 %v602, 7
    %v604 = vsub.s32 %v601, %v603
    %v605 = vrot.slane %v578, %v604
    %v607 = vunpack.c.l.s4 1983009808
    %v608 = vunpack.c.0.s8 %v607
    %v609 = vlaneseq
    %v610 = vshrl.u32 %v609, 7
    %v611 = vsub.s32 %v608, %v610
    %v612 = vrot.slane %v598, %v611
    %v613 = vcombine.high %v605, %v605
    %v614 = vcombine.high %v612, %v612
    %v623 = vpack.c.bf16 %v588, %v588
    %v624 = vpack.c.bf16 %v596, %v596
    %v625 = vpack.c.bf16 %v595, %v595
    %v626 = vpack.c.bf16 %v597, %v597
    %v627 = vpack.c.bf16 %v605, %v605
    %v628 = vpack.c.bf16 %v613, %v613
    %v629 = vpack.c.bf16 %v612, %v612
    %v630 = vpack.c.bf16 %v614, %v614
    %631 = vmatprep.subr.bf16.mxu0 0
    %632 = vmatpush1.bf16.msra.mxu0 %v239
    %633 = vmatprep.subr.bf16.mxu0 0
    %634 = vmatpush1.bf16.msra.mxu0 %v240
    %635 = vmatprep.subr.bf16.mxu0 0
    %636 = vmatpush1.bf16.msra.mxu0 %v241
    %637 = vmatprep.subr.bf16.mxu0 0
    %638 = vmatpush1.bf16.msra.mxu0 %v242
    %639 = vmatprep.subr.bf16.mxu0 0
    %640 = vmatpush1.bf16.msra.mxu0 %v243
    %641 = vmatprep.subr.bf16.mxu0 0
    %642 = vmatpush1.bf16.msra.mxu0 %v244
    %643 = vmatprep.subr.bf16.mxu0 0
    %644 = vmatpush1.bf16.msra.mxu0 %v245
    %645 = vmatprep.subr.bf16.mxu0 0
    %646 = vmatpush1.bf16.msra.mxu0 %v246
    %647 = vmatprep.subr.bf16.mxu0 0
    %648 = vmatpush1.bf16.msra.mxu0 %v247
    %649 = vmatprep.subr.bf16.mxu0 0
    %650 = vmatpush1.bf16.msra.mxu0 %v248
    %651 = vmatprep.subr.bf16.mxu0 0
    %652 = vmatpush1.bf16.msra.mxu0 %v249
    %653 = vmatprep.subr.bf16.mxu0 0
    %654 = vmatpush1.bf16.msra.mxu0 %v250
    %655 = vmatprep.subr.bf16.mxu0 0
    %656 = vmatpush1.bf16.msra.mxu0 %v251
    %657 = vmatprep.subr.bf16.mxu0 0
    %658 = vmatpush1.bf16.msra.mxu0 %v252
    %659 = vmatprep.subr.bf16.mxu0 0
    %660 = vmatpush1.bf16.msra.mxu0 %v253
    %661 = vmatprep.subr.bf16.mxu0 0
    %662 = vmatpush1.bf16.msra.mxu0 %v254
    %663 = vmatprep.mubr.bf16.mxu0 %v624
    %664 = vmatmul.mubr.bf16.gmra.mrb[0].mxu0 %v623
    %v665 = vpop.f32.mrb[0].mxu0
    %v666 = vadd.f32 %v310, %v665
    %v667 = vpop.f32.mrb[0].mxu0
    %v668 = vpop.f32.mrb[0].mxu0
    %v669 = vpop.f32.mrb[0].mxu0
    %670 = vdwg.mxu0
    %671 = vmatprep.subr.bf16.mxu0 0
    %672 = vmatpush1.bf16.msra.mxu0 %v255
    %673 = vmatprep.subr.bf16.mxu0 0
    %674 = vmatpush1.bf16.msra.mxu0 %v256
    %675 = vmatprep.subr.bf16.mxu0 0
    %676 = vmatpush1.bf16.msra.mxu0 %v257
    %677 = vmatprep.subr.bf16.mxu0 0
    %678 = vmatpush1.bf16.msra.mxu0 %v258
    %679 = vmatprep.subr.bf16.mxu0 0
    %680 = vmatpush1.bf16.msra.mxu0 %v259
    %681 = vmatprep.subr.bf16.mxu0 0
    %682 = vmatpush1.bf16.msra.mxu0 %v260
    %683 = vmatprep.subr.bf16.mxu0 0
    %684 = vmatpush1.bf16.msra.mxu0 %v261
    %685 = vmatprep.subr.bf16.mxu0 0
    %686 = vmatpush1.bf16.msra.mxu0 %v262
    %687 = vmatprep.subr.bf16.mxu0 0
    %688 = vmatpush1.bf16.msra.mxu0 %v263
    %689 = vmatprep.subr.bf16.mxu0 0
    %690 = vmatpush1.bf16.msra.mxu0 %v264
    %691 = vmatprep.subr.bf16.mxu0 0
    %692 = vmatpush1.bf16.msra.mxu0 %v265
    %693 = vmatprep.subr.bf16.mxu0 0
    %694 = vmatpush1.bf16.msra.mxu0 %v266
    %695 = vmatprep.subr.bf16.mxu0 0
    %696 = vmatpush1.bf16.msra.mxu0 %v267
    %697 = vmatprep.subr.bf16.mxu0 0
    %698 = vmatpush1.bf16.msra.mxu0 %v268
    %699 = vmatprep.subr.bf16.mxu0 0
    %700 = vmatpush1.bf16.msra.mxu0 %v269
    %701 = vmatprep.subr.bf16.mxu0 0
    %702 = vmatpush1.bf16.msra.mxu0 %v270
    %703 = vmatprep.mubr.bf16.mxu0 %v626
    %704 = vmatmul.mubr.bf16.gmra.mrb[0].mxu0 %v625
    %v705 = vpop.f32.mrb[0].mxu0
    %v706 = vadd.f32 %v666, %v705
    %v707 = vpop.f32.mrb[0].mxu0
    %v708 = vpop.f32.mrb[0].mxu0
    %v709 = vpop.f32.mrb[0].mxu0
    %710 = vdwg.mxu0
    %711 = vmatprep.subr.bf16.mxu0 0
    %712 = vmatpush1.bf16.msra.mxu0 %v271
    %713 = vmatprep.subr.bf16.mxu0 0
    %714 = vmatpush1.bf16.msra.mxu0 %v272
    %715 = vmatprep.subr.bf16.mxu0 0
    %716 = vmatpush1.bf16.msra.mxu0 %v273
    %717 = vmatprep.subr.bf16.mxu0 0
    %718 = vmatpush1.bf16.msra.mxu0 %v274
    %719 = vmatprep.subr.bf16.mxu0 0
    %720 = vmatpush1.bf16.msra.mxu0 %v275
    %721 = vmatprep.subr.bf16.mxu0 0
    %722 = vmatpush1.bf16.msra.mxu0 %v276
    %723 = vmatprep.subr.bf16.mxu0 0
    %724 = vmatpush1.bf16.msra.mxu0 %v277
    %725 = vmatprep.subr.bf16.mxu0 0
    %726 = vmatpush1.bf16.msra.mxu0 %v278
    %727 = vmatprep.subr.bf16.mxu0 0
    %728 = vmatpush1.bf16.msra.mxu0 %v279
    %729 = vmatprep.subr.bf16.mxu0 0
    %730 = vmatpush1.bf16.msra.mxu0 %v280
    %731 = vmatprep.subr.bf16.mxu0 0
    %732 = vmatpush1.bf16.msra.mxu0 %v281
    %733 = vmatprep.subr.bf16.mxu0 0
    %734 = vmatpush1.bf16.msra.mxu0 %v282
    %735 = vmatprep.subr.bf16.mxu0 0
    %736 = vmatpush1.bf16.msra.mxu0 %v283
    %737 = vmatprep.subr.bf16.mxu0 0
    %738 = vmatpush1.bf16.msra.mxu0 %v284
    %739 = vmatprep.subr.bf16.mxu0 0
    %740 = vmatpush1.bf16.msra.mxu0 %v285
    %741 = vmatprep.subr.bf16.mxu0 0
    %742 = vmatpush1.bf16.msra.mxu0 %v286
    %743 = vmatprep.mubr.bf16.mxu0 %v628
    %744 = vmatmul.mubr.bf16.gmra.mrb[0].mxu0 %v627
    %v745 = vpop.f32.mrb[0].mxu0
    %v746 = vadd.f32 %v706, %v745
    %v747 = vpop.f32.mrb[0].mxu0
    %v748 = vpop.f32.mrb[0].mxu0
    %v749 = vpop.f32.mrb[0].mxu0
    %750 = vdwg.mxu0
    %751 = vmatprep.subr.bf16.mxu0 0
    %752 = vmatpush1.bf16.msra.mxu0 %v287
    %753 = vmatprep.subr.bf16.mxu0 0
    %754 = vmatpush1.bf16.msra.mxu0 %v288
    %755 = vmatprep.subr.bf16.mxu0 0
    %756 = vmatpush1.bf16.msra.mxu0 %v289
    %757 = vmatprep.subr.bf16.mxu0 0
    %758 = vmatpush1.bf16.msra.mxu0 %v290
    %759 = vmatprep.subr.bf16.mxu0 0
    %760 = vmatpush1.bf16.msra.mxu0 %v291
    %761 = vmatprep.subr.bf16.mxu0 0
    %762 = vmatpush1.bf16.msra.mxu0 %v292
    %763 = vmatprep.subr.bf16.mxu0 0
    %764 = vmatpush1.bf16.msra.mxu0 %v293
    %765 = vmatprep.subr.bf16.mxu0 0
    %766 = vmatpush1.bf16.msra.mxu0 %v294
    %767 = vmatprep.subr.bf16.mxu0 0
    %768 = vmatpush1.bf16.msra.mxu0 %v295
    %769 = vmatprep.subr.bf16.mxu0 0
    %770 = vmatpush1.bf16.msra.mxu0 %v296
    %771 = vmatprep.subr.bf16.mxu0 0
    %772 = vmatpush1.bf16.msra.mxu0 %v297
    %773 = vmatprep.subr.bf16.mxu0 0
    %774 = vmatpush1.bf16.msra.mxu0 %v298
    %775 = vmatprep.subr.bf16.mxu0 0
    %776 = vmatpush1.bf16.msra.mxu0 %v299
    %777 = vmatprep.subr.bf16.mxu0 0
    %778 = vmatpush1.bf16.msra.mxu0 %v300
    %779 = vmatprep.subr.bf16.mxu0 0
    %780 = vmatpush1.bf16.msra.mxu0 %v301
    %781 = vmatprep.subr.bf16.mxu0 0
    %782 = vmatpush1.bf16.msra.mxu0 %v302
    %783 = vmatprep.mubr.bf16.mxu0 %v630
    %784 = vmatmul.mubr.bf16.gmra.mrb[0].mxu0 %v629
    %v785 = vpop.f32.mrb[0].mxu0
    %v786 = vadd.f32 %v746, %v785
    %v787 = vpop.f32.mrb[0].mxu0
    %v788 = vpop.f32.mrb[0].mxu0
    %v789 = vpop.f32.mrb[0].mxu0
    %790 = vdwg.mxu0
    %v791 = vsel %vm473, %v786, -1e+30
    %v792 = vsel %vm475, %v791, -inf
    %793 = vmax.xlane.f32.xlu0 %v792
    %v794 = vpop.xlane.xlu0 %793
    %v795 = vsub.f32 %v791, %v794
    %v796 = vmul.f32 %v795, 1.442695
    %v797 = vpow.pop %v796
    %v798 = vsel %vm475, %v797, 0.0
    %799 = vadd.xlane.f32.xlu0 %v798
    %v800 = vpop.xlane.xlu0 %799
    %v801 = vrcp.pop %v800
    %v802 = vmul.f32 %v797, %v801
    %v803 = vsub.f32 %v802, %v489
    %v804 = vsel %vm473, %v803, 0.0
    %v805 = vpack.c.bf16 %v804, %v804
    %806 = vmatprep.subr.bf16.mxu0 0
    %807 = vmatpush1.bf16.xpose.msra.mxu0 %v239
    %808 = vmatprep.subr.bf16.mxu0 0
    %809 = vmatpush1.bf16.xpose.msra.mxu0 %v240
    %810 = vmatprep.subr.bf16.mxu0 0
    %811 = vmatpush1.bf16.xpose.msra.mxu0 %v241
    %812 = vmatprep.subr.bf16.mxu0 0
    %813 = vmatpush1.bf16.xpose.msra.mxu0 %v242
    %814 = vmatprep.subr.bf16.mxu0 0
    %815 = vmatpush1.bf16.xpose.msra.mxu0 %v243
    %816 = vmatprep.subr.bf16.mxu0 0
    %817 = vmatpush1.bf16.xpose.msra.mxu0 %v244
    %818 = vmatprep.subr.bf16.mxu0 0
    %819 = vmatpush1.bf16.xpose.msra.mxu0 %v245
    %820 = vmatprep.subr.bf16.mxu0 0
    %821 = vmatpush1.bf16.xpose.msra.mxu0 %v246
    %822 = vmatprep.subr.bf16.mxu0 0
    %823 = vmatpush1.bf16.xpose.msra.mxu0 %v247
    %824 = vmatprep.subr.bf16.mxu0 0
    %825 = vmatpush1.bf16.xpose.msra.mxu0 %v248
    %826 = vmatprep.subr.bf16.mxu0 0
    %827 = vmatpush1.bf16.xpose.msra.mxu0 %v249
    %828 = vmatprep.subr.bf16.mxu0 0
    %829 = vmatpush1.bf16.xpose.msra.mxu0 %v250
    %830 = vmatprep.subr.bf16.mxu0 0
    %831 = vmatpush1.bf16.xpose.msra.mxu0 %v251
    %832 = vmatprep.subr.bf16.mxu0 0
    %833 = vmatpush1.bf16.xpose.msra.mxu0 %v252
    %834 = vmatprep.subr.bf16.mxu0 0
    %835 = vmatpush1.bf16.xpose.msra.mxu0 %v253
    %836 = vmatprep.subr.bf16.mxu0 0
    %837 = vmatpush1.bf16.xpose.msra.mxu0 %v254
    %838 = vmatprep.mubr.bf16.mxu0 0
    %839 = vmatmul.mubr.bf16.gmra.mrb[0].mxu0 %v805
    %v840 = vpop.f32.mrb[0].mxu0
    %v841 = vadd.f32 0.0, %v840
    %v842 = vpop.f32.mrb[0].mxu0
    %v843 = vadd.f32 0.0, %v842
    %v844 = vpop.f32.mrb[0].mxu0
    %v845 = vpop.f32.mrb[0].mxu0
    %846 = vdwg.mxu0
    %847 = vmatprep.subr.bf16.mxu0 0
    %848 = vmatpush1.bf16.xpose.msra.mxu0 %v255
    %849 = vmatprep.subr.bf16.mxu0 0
    %850 = vmatpush1.bf16.xpose.msra.mxu0 %v256
    %851 = vmatprep.subr.bf16.mxu0 0
    %852 = vmatpush1.bf16.xpose.msra.mxu0 %v257
    %853 = vmatprep.subr.bf16.mxu0 0
    %854 = vmatpush1.bf16.xpose.msra.mxu0 %v258
    %855 = vmatprep.subr.bf16.mxu0 0
    %856 = vmatpush1.bf16.xpose.msra.mxu0 %v259
    %857 = vmatprep.subr.bf16.mxu0 0
    %858 = vmatpush1.bf16.xpose.msra.mxu0 %v260
    %859 = vmatprep.subr.bf16.mxu0 0
    %860 = vmatpush1.bf16.xpose.msra.mxu0 %v261
    %861 = vmatprep.subr.bf16.mxu0 0
    %862 = vmatpush1.bf16.xpose.msra.mxu0 %v262
    %863 = vmatprep.subr.bf16.mxu0 0
    %864 = vmatpush1.bf16.xpose.msra.mxu0 %v263
    %865 = vmatprep.subr.bf16.mxu0 0
    %866 = vmatpush1.bf16.xpose.msra.mxu0 %v264
    %867 = vmatprep.subr.bf16.mxu0 0
    %868 = vmatpush1.bf16.xpose.msra.mxu0 %v265
    %869 = vmatprep.subr.bf16.mxu0 0
    %870 = vmatpush1.bf16.xpose.msra.mxu0 %v266
    %871 = vmatprep.subr.bf16.mxu0 0
    %872 = vmatpush1.bf16.xpose.msra.mxu0 %v267
    %873 = vmatprep.subr.bf16.mxu0 0
    %874 = vmatpush1.bf16.xpose.msra.mxu0 %v268
    %875 = vmatprep.subr.bf16.mxu0 0
    %876 = vmatpush1.bf16.xpose.msra.mxu0 %v269
    %877 = vmatprep.subr.bf16.mxu0 0
    %878 = vmatpush1.bf16.xpose.msra.mxu0 %v270
    %879 = vmatprep.mubr.bf16.mxu0 0
    %880 = vmatmul.mubr.bf16.gmra.mrb[0].mxu0 %v805
    %v881 = vpop.f32.mrb[0].mxu0
    %v882 = vadd.f32 0.0, %v881
    %v883 = vpop.f32.mrb[0].mxu0
    %v884 = vadd.f32 0.0, %v883
    %v885 = vpop.f32.mrb[0].mxu0
    %v886 = vpop.f32.mrb[0].mxu0
    %887 = vdwg.mxu0
    %888 = vmatprep.subr.bf16.mxu0 0
    %889 = vmatpush1.bf16.xpose.msra.mxu0 %v271
    %890 = vmatprep.subr.bf16.mxu0 0
    %891 = vmatpush1.bf16.xpose.msra.mxu0 %v272
    %892 = vmatprep.subr.bf16.mxu0 0
    %893 = vmatpush1.bf16.xpose.msra.mxu0 %v273
    %894 = vmatprep.subr.bf16.mxu0 0
    %895 = vmatpush1.bf16.xpose.msra.mxu0 %v274
    %896 = vmatprep.subr.bf16.mxu0 0
    %897 = vmatpush1.bf16.xpose.msra.mxu0 %v275
    %898 = vmatprep.subr.bf16.mxu0 0
    %899 = vmatpush1.bf16.xpose.msra.mxu0 %v276
    %900 = vmatprep.subr.bf16.mxu0 0
    %901 = vmatpush1.bf16.xpose.msra.mxu0 %v277
    %902 = vmatprep.subr.bf16.mxu0 0
    %903 = vmatpush1.bf16.xpose.msra.mxu0 %v278
    %904 = vmatprep.subr.bf16.mxu0 0
    %905 = vmatpush1.bf16.xpose.msra.mxu0 %v279
    %906 = vmatprep.subr.bf16.mxu0 0
    %907 = vmatpush1.bf16.xpose.msra.mxu0 %v280
    %908 = vmatprep.subr.bf16.mxu0 0
    %909 = vmatpush1.bf16.xpose.msra.mxu0 %v281
    %910 = vmatprep.subr.bf16.mxu0 0
    %911 = vmatpush1.bf16.xpose.msra.mxu0 %v282
    %912 = vmatprep.subr.bf16.mxu0 0
    %913 = vmatpush1.bf16.xpose.msra.mxu0 %v283
    %914 = vmatprep.subr.bf16.mxu0 0
    %915 = vmatpush1.bf16.xpose.msra.mxu0 %v284
    %916 = vmatprep.subr.bf16.mxu0 0
    %917 = vmatpush1.bf16.xpose.msra.mxu0 %v285
    %918 = vmatprep.subr.bf16.mxu0 0
    %919 = vmatpush1.bf16.xpose.msra.mxu0 %v286
    %920 = vmatprep.mubr.bf16.mxu0 0
    %921 = vmatmul.mubr.bf16.gmra.mrb[0].mxu0 %v805
    %v922 = vpop.f32.mrb[0].mxu0
    %v923 = vadd.f32 0.0, %v922
    %v924 = vpop.f32.mrb[0].mxu0
    %v925 = vadd.f32 0.0, %v924
    %v926 = vpop.f32.mrb[0].mxu0
    %v927 = vpop.f32.mrb[0].mxu0
    %928 = vdwg.mxu0
    %929 = vmatprep.subr.bf16.mxu0 0
    %930 = vmatpush1.bf16.xpose.msra.mxu0 %v287
    %931 = vmatprep.subr.bf16.mxu0 0
    %932 = vmatpush1.bf16.xpose.msra.mxu0 %v288
    %933 = vmatprep.subr.bf16.mxu0 0
    %934 = vmatpush1.bf16.xpose.msra.mxu0 %v289
    %935 = vmatprep.subr.bf16.mxu0 0
    %936 = vmatpush1.bf16.xpose.msra.mxu0 %v290
    %937 = vmatprep.subr.bf16.mxu0 0
    %938 = vmatpush1.bf16.xpose.msra.mxu0 %v291
    %939 = vmatprep.subr.bf16.mxu0 0
    %940 = vmatpush1.bf16.xpose.msra.mxu0 %v292
    %941 = vmatprep.subr.bf16.mxu0 0
    %942 = vmatpush1.bf16.xpose.msra.mxu0 %v293
    %943 = vmatprep.subr.bf16.mxu0 0
    %944 = vmatpush1.bf16.xpose.msra.mxu0 %v294
    %945 = vmatprep.subr.bf16.mxu0 0
    %946 = vmatpush1.bf16.xpose.msra.mxu0 %v295
    %947 = vmatprep.subr.bf16.mxu0 0
    %948 = vmatpush1.bf16.xpose.msra.mxu0 %v296
    %949 = vmatprep.subr.bf16.mxu0 0
    %950 = vmatpush1.bf16.xpose.msra.mxu0 %v297
    %951 = vmatprep.subr.bf16.mxu0 0
    %952 = vmatpush1.bf16.xpose.msra.mxu0 %v298
    %953 = vmatprep.subr.bf16.mxu0 0
    %954 = vmatpush1.bf16.xpose.msra.mxu0 %v299
    %955 = vmatprep.subr.bf16.mxu0 0
    %956 = vmatpush1.bf16.xpose.msra.mxu0 %v300
    %957 = vmatprep.subr.bf16.mxu0 0
    %958 = vmatpush1.bf16.xpose.msra.mxu0 %v301
    %959 = vmatprep.subr.bf16.mxu0 0
    %960 = vmatpush1.bf16.xpose.msra.mxu0 %v302
    %961 = vmatprep.mubr.bf16.mxu0 0
    %962 = vmatmul.mubr.bf16.gmra.mrb[0].mxu0 %v805
    %v963 = vpop.f32.mrb[0].mxu0
    %v964 = vadd.f32 0.0, %v963
    %v965 = vpop.f32.mrb[0].mxu0
    %v966 = vadd.f32 0.0, %v965
    %v967 = vpop.f32.mrb[0].mxu0
    %v968 = vpop.f32.mrb[0].mxu0
    %969 = vdwg.mxu0
    %v970 = vmul.f32 %v841, %v841
    %v971 = vmul.f32 %v843, %v843
    %v972 = vmul.f32 %v882, %v882
    %v973 = vmul.f32 %v884, %v884
    %v974 = vmul.f32 %v923, %v923
    %v975 = vmul.f32 %v925, %v925
    %v976 = vmul.f32 %v964, %v964
    %v977 = vmul.f32 %v966, %v966
    %v978 = vsel %vm475, %v970, 0.0
    %v979 = vsel %vm475, %v971, 0.0
    %v980 = vadd.f32 %v978, %v979
    %v981 = vsel %vm475, %v972, 0.0
    %v982 = vadd.f32 %v980, %v981
    %v983 = vsel %vm475, %v973, 0.0
    %v984 = vadd.f32 %v982, %v983
    %v985 = vsel %vm475, %v974, 0.0
    %v986 = vadd.f32 %v984, %v985
    %v987 = vsel %vm475, %v975, 0.0
    %v988 = vadd.f32 %v986, %v987
    %v989 = vsel %vm475, %v976, 0.0
    %v990 = vadd.f32 %v988, %v989
    %v991 = vsel %vm475, %v977, 0.0
    %v992 = vadd.f32 %v990, %v991
    %993 = vadd.xlane.f32.xlu0 %v992
    %v994 = vpop.xlane.xlu0 %993
    %v995 = vrsqrt.pop %v994
    %v996 = vmul.f32 %v994, %v995
    %vm997 = vcmp.eq.f32.partialorder %v994, inf
    %v998 = vsel %vm997, %v994, %v996
    %vm999 = vcmp.eq.f32.partialorder %v994, 0.0
    %v1000 = vand.u32 %v994, 2147483648
    %v1001 = vsel %vm999, %v1000, %v998
    %v1002 = vadd.f32 %v1001, 1e-10
    %v1003 = vrcp.pop %v1002
    %v1004 = vmul.f32 %v841, %v1003
    %v1005 = vmul.f32 %v843, %v1003
    %v1006 = vmul.f32 %v882, %v1003
    %v1007 = vmul.f32 %v884, %v1003
    %v1008 = vmul.f32 %v923, %v1003
    %v1009 = vmul.f32 %v925, %v1003
    %v1010 = vmul.f32 %v964, %v1003
    %v1011 = vmul.f32 %v966, %v1003
    %v1012 = vmul.f32 %v1004, 10.0
    %v1013 = vmul.f32 %v1005, 10.0
    %v1014 = vmul.f32 %v1006, 10.0
    %v1015 = vmul.f32 %v1007, 10.0
    %v1016 = vmul.f32 %v1008, 10.0
    %v1017 = vmul.f32 %v1009, 10.0
    %v1018 = vmul.f32 %v1010, 10.0
    %v1019 = vmul.f32 %v1011, 10.0
    %v1028 = vcombine.low %v1012, %v1013
    %v1029 = vcombine.low %v1014, %v1015
    %v1031 = vunpack.c.l.s4 1983009808
    %v1032 = vunpack.c.0.s8 %v1031
    %v1033 = vlaneseq
    %v1034 = vshrl.u32 %v1033, 7
    %v1035 = vsub.s32 %v1032, %v1034
    %v1036 = vrot.slane %v1028, %v1035
    %v1038 = vunpack.c.l.s4 1983009808
    %v1039 = vunpack.c.0.s8 %v1038
    %v1040 = vlaneseq
    %v1041 = vshrl.u32 %v1040, 7
    %v1042 = vsub.s32 %v1039, %v1041
    %v1043 = vrot.slane %v1029, %v1042
    %v1044 = vcombine.low %v1036, %v1043
    %v1045 = vcombine.low %v1016, %v1017
    %v1046 = vcombine.low %v1018, %v1019
    %v1048 = vunpack.c.l.s4 1983009808
    %v1049 = vunpack.c.0.s8 %v1048
    %v1050 = vlaneseq
    %v1051 = vshrl.u32 %v1050, 7
    %v1052 = vsub.s32 %v1049, %v1051
    %v1053 = vrot.slane %v1045, %v1052
    %v1055 = vunpack.c.l.s4 1983009808
    %v1056 = vunpack.c.0.s8 %v1055
    %v1057 = vlaneseq
    %v1058 = vshrl.u32 %v1057, 7
    %v1059 = vsub.s32 %v1056, %v1058
    %v1060 = vrot.slane %v1046, %v1059
    %v1061 = vcombine.low %v1053, %v1060
    %v1064 = vadd.f32 %v56, %v1044
    %v1065 = vadd.f32 %v57, %v1061
    %v1068 = vcombine.high %v1064, %v1064
    %v1070 = vunpack.c.l.s4 1983009808
    %v1071 = vunpack.c.0.s8 %v1070
    %v1072 = vlaneseq
    %v1073 = vshrl.u32 %v1072, 7
    %v1074 = vsub.s32 %v1071, %v1073
    %v1075 = vrot.slane %v1064, %v1074
    %v1077 = vunpack.c.l.s4 1983009808
    %v1078 = vunpack.c.0.s8 %v1077
    %v1079 = vlaneseq
    %v1080 = vshrl.u32 %v1079, 7
    %v1081 = vsub.s32 %v1078, %v1080
    %v1082 = vrot.slane %v1068, %v1081
    %v1083 = vcombine.high %v1075, %v1075
    %v1084 = vcombine.high %v1082, %v1082
    %v1085 = vcombine.high %v1065, %v1065
    %v1087 = vunpack.c.l.s4 1983009808
    %v1088 = vunpack.c.0.s8 %v1087
    %v1089 = vlaneseq
    %v1090 = vshrl.u32 %v1089, 7
    %v1091 = vsub.s32 %v1088, %v1090
    %v1092 = vrot.slane %v1065, %v1091
    %v1094 = vunpack.c.l.s4 1983009808
    %v1095 = vunpack.c.0.s8 %v1094
    %v1096 = vlaneseq
    %v1097 = vshrl.u32 %v1096, 7
    %v1098 = vsub.s32 %v1095, %v1097
    %v1099 = vrot.slane %v1085, %v1098
    %v1100 = vcombine.high %v1092, %v1092
    %v1101 = vcombine.high %v1099, %v1099
    %v1110 = vpack.c.bf16 %v1075, %v1075
    %v1111 = vpack.c.bf16 %v1083, %v1083
    %v1112 = vpack.c.bf16 %v1082, %v1082
    %v1113 = vpack.c.bf16 %v1084, %v1084
    %v1114 = vpack.c.bf16 %v1092, %v1092
    %v1115 = vpack.c.bf16 %v1100, %v1100
    %v1116 = vpack.c.bf16 %v1099, %v1099
    %v1117 = vpack.c.bf16 %v1101, %v1101
    %1118 = vmatprep.subr.bf16.mxu0 0
    %1119 = vmatpush1.bf16.msra.mxu0 %v239
    %1120 = vmatprep.subr.bf16.mxu0 0
    %1121 = vmatpush1.bf16.msra.mxu0 %v240
    %1122 = vmatprep.subr.bf16.mxu0 0
    %1123 = vmatpush1.bf16.msra.mxu0 %v241
    %1124 = vmatprep.subr.bf16.mxu0 0
    %1125 = vmatpush1.bf16.msra.mxu0 %v242
    %1126 = vmatprep.subr.bf16.mxu0 0
    %1127 = vmatpush1.bf16.msra.mxu0 %v243
    %1128 = vmatprep.subr.bf16.mxu0 0
    %1129 = vmatpush1.bf16.msra.mxu0 %v244
    %1130 = vmatprep.subr.bf16.mxu0 0
    %1131 = vmatpush1.bf16.msra.mxu0 %v245
    %1132 = vmatprep.subr.bf16.mxu0 0
    %1133 = vmatpush1.bf16.msra.mxu0 %v246
    %1134 = vmatprep.subr.bf16.mxu0 0
    %1135 = vmatpush1.bf16.msra.mxu0 %v247
    %1136 = vmatprep.subr.bf16.mxu0 0
    %1137 = vmatpush1.bf16.msra.mxu0 %v248
    %1138 = vmatprep.subr.bf16.mxu0 0
    %1139 = vmatpush1.bf16.msra.mxu0 %v249
    %1140 = vmatprep.subr.bf16.mxu0 0
    %1141 = vmatpush1.bf16.msra.mxu0 %v250
    %1142 = vmatprep.subr.bf16.mxu0 0
    %1143 = vmatpush1.bf16.msra.mxu0 %v251
    %1144 = vmatprep.subr.bf16.mxu0 0
    %1145 = vmatpush1.bf16.msra.mxu0 %v252
    %1146 = vmatprep.subr.bf16.mxu0 0
    %1147 = vmatpush1.bf16.msra.mxu0 %v253
    %1148 = vmatprep.subr.bf16.mxu0 0
    %1149 = vmatpush1.bf16.msra.mxu0 %v254
    %1150 = vmatprep.mubr.bf16.mxu0 %v1111
    %1151 = vmatmul.mubr.bf16.gmra.mrb[0].mxu0 %v1110
    %v1152 = vpop.f32.mrb[0].mxu0
    %v1153 = vadd.f32 %v310, %v1152
    %v1154 = vpop.f32.mrb[0].mxu0
    %v1155 = vpop.f32.mrb[0].mxu0
    %v1156 = vpop.f32.mrb[0].mxu0
    %1157 = vdwg.mxu0
    %1158 = vmatprep.subr.bf16.mxu0 0
    %1159 = vmatpush1.bf16.msra.mxu0 %v255
    %1160 = vmatprep.subr.bf16.mxu0 0
    %1161 = vmatpush1.bf16.msra.mxu0 %v256
    %1162 = vmatprep.subr.bf16.mxu0 0
    %1163 = vmatpush1.bf16.msra.mxu0 %v257
    %1164 = vmatprep.subr.bf16.mxu0 0
    %1165 = vmatpush1.bf16.msra.mxu0 %v258
    %1166 = vmatprep.subr.bf16.mxu0 0
    %1167 = vmatpush1.bf16.msra.mxu0 %v259
    %1168 = vmatprep.subr.bf16.mxu0 0
    %1169 = vmatpush1.bf16.msra.mxu0 %v260
    %1170 = vmatprep.subr.bf16.mxu0 0
    %1171 = vmatpush1.bf16.msra.mxu0 %v261
    %1172 = vmatprep.subr.bf16.mxu0 0
    %1173 = vmatpush1.bf16.msra.mxu0 %v262
    %1174 = vmatprep.subr.bf16.mxu0 0
    %1175 = vmatpush1.bf16.msra.mxu0 %v263
    %1176 = vmatprep.subr.bf16.mxu0 0
    %1177 = vmatpush1.bf16.msra.mxu0 %v264
    %1178 = vmatprep.subr.bf16.mxu0 0
    %1179 = vmatpush1.bf16.msra.mxu0 %v265
    %1180 = vmatprep.subr.bf16.mxu0 0
    %1181 = vmatpush1.bf16.msra.mxu0 %v266
    %1182 = vmatprep.subr.bf16.mxu0 0
    %1183 = vmatpush1.bf16.msra.mxu0 %v267
    %1184 = vmatprep.subr.bf16.mxu0 0
    %1185 = vmatpush1.bf16.msra.mxu0 %v268
    %1186 = vmatprep.subr.bf16.mxu0 0
    %1187 = vmatpush1.bf16.msra.mxu0 %v269
    %1188 = vmatprep.subr.bf16.mxu0 0
    %1189 = vmatpush1.bf16.msra.mxu0 %v270
    %1190 = vmatprep.mubr.bf16.mxu0 %v1113
    %1191 = vmatmul.mubr.bf16.gmra.mrb[0].mxu0 %v1112
    %v1192 = vpop.f32.mrb[0].mxu0
    %v1193 = vadd.f32 %v1153, %v1192
    %v1194 = vpop.f32.mrb[0].mxu0
    %v1195 = vpop.f32.mrb[0].mxu0
    %v1196 = vpop.f32.mrb[0].mxu0
    %1197 = vdwg.mxu0
    %1198 = vmatprep.subr.bf16.mxu0 0
    %1199 = vmatpush1.bf16.msra.mxu0 %v271
    %1200 = vmatprep.subr.bf16.mxu0 0
    %1201 = vmatpush1.bf16.msra.mxu0 %v272
    %1202 = vmatprep.subr.bf16.mxu0 0
    %1203 = vmatpush1.bf16.msra.mxu0 %v273
    %1204 = vmatprep.subr.bf16.mxu0 0
    %1205 = vmatpush1.bf16.msra.mxu0 %v274
    %1206 = vmatprep.subr.bf16.mxu0 0
    %1207 = vmatpush1.bf16.msra.mxu0 %v275
    %1208 = vmatprep.subr.bf16.mxu0 0
    %1209 = vmatpush1.bf16.msra.mxu0 %v276
    %1210 = vmatprep.subr.bf16.mxu0 0
    %1211 = vmatpush1.bf16.msra.mxu0 %v277
    %1212 = vmatprep.subr.bf16.mxu0 0
    %1213 = vmatpush1.bf16.msra.mxu0 %v278
    %1214 = vmatprep.subr.bf16.mxu0 0
    %1215 = vmatpush1.bf16.msra.mxu0 %v279
    %1216 = vmatprep.subr.bf16.mxu0 0
    %1217 = vmatpush1.bf16.msra.mxu0 %v280
    %1218 = vmatprep.subr.bf16.mxu0 0
    %1219 = vmatpush1.bf16.msra.mxu0 %v281
    %1220 = vmatprep.subr.bf16.mxu0 0
    %1221 = vmatpush1.bf16.msra.mxu0 %v282
    %1222 = vmatprep.subr.bf16.mxu0 0
    %1223 = vmatpush1.bf16.msra.mxu0 %v283
    %1224 = vmatprep.subr.bf16.mxu0 0
    %1225 = vmatpush1.bf16.msra.mxu0 %v284
    %1226 = vmatprep.subr.bf16.mxu0 0
    %1227 = vmatpush1.bf16.msra.mxu0 %v285
    %1228 = vmatprep.subr.bf16.mxu0 0
    %1229 = vmatpush1.bf16.msra.mxu0 %v286
    %1230 = vmatprep.mubr.bf16.mxu0 %v1115
    %1231 = vmatmul.mubr.bf16.gmra.mrb[0].mxu0 %v1114
    %v1232 = vpop.f32.mrb[0].mxu0
    %v1233 = vadd.f32 %v1193, %v1232
    %v1234 = vpop.f32.mrb[0].mxu0
    %v1235 = vpop.f32.mrb[0].mxu0
    %v1236 = vpop.f32.mrb[0].mxu0
    %1237 = vdwg.mxu0
    %1238 = vmatprep.subr.bf16.mxu0 0
    %1239 = vmatpush1.bf16.msra.mxu0 %v287
    %1240 = vmatprep.subr.bf16.mxu0 0
    %1241 = vmatpush1.bf16.msra.mxu0 %v288
    %1242 = vmatprep.subr.bf16.mxu0 0
    %1243 = vmatpush1.bf16.msra.mxu0 %v289
    %1244 = vmatprep.subr.bf16.mxu0 0
    %1245 = vmatpush1.bf16.msra.mxu0 %v290
    %1246 = vmatprep.subr.bf16.mxu0 0
    %1247 = vmatpush1.bf16.msra.mxu0 %v291
    %1248 = vmatprep.subr.bf16.mxu0 0
    %1249 = vmatpush1.bf16.msra.mxu0 %v292
    %1250 = vmatprep.subr.bf16.mxu0 0
    %1251 = vmatpush1.bf16.msra.mxu0 %v293
    %1252 = vmatprep.subr.bf16.mxu0 0
    %1253 = vmatpush1.bf16.msra.mxu0 %v294
    %1254 = vmatprep.subr.bf16.mxu0 0
    %1255 = vmatpush1.bf16.msra.mxu0 %v295
    %1256 = vmatprep.subr.bf16.mxu0 0
    %1257 = vmatpush1.bf16.msra.mxu0 %v296
    %1258 = vmatprep.subr.bf16.mxu0 0
    %1259 = vmatpush1.bf16.msra.mxu0 %v297
    %1260 = vmatprep.subr.bf16.mxu0 0
    %1261 = vmatpush1.bf16.msra.mxu0 %v298
    %1262 = vmatprep.subr.bf16.mxu0 0
    %1263 = vmatpush1.bf16.msra.mxu0 %v299
    %1264 = vmatprep.subr.bf16.mxu0 0
    %1265 = vmatpush1.bf16.msra.mxu0 %v300
    %1266 = vmatprep.subr.bf16.mxu0 0
    %1267 = vmatpush1.bf16.msra.mxu0 %v301
    %1268 = vmatprep.subr.bf16.mxu0 0
    %1269 = vmatpush1.bf16.msra.mxu0 %v302
    %1270 = vmatprep.mubr.bf16.mxu0 %v1117
    %1271 = vmatmul.mubr.bf16.gmra.mrb[0].mxu0 %v1116
    %v1272 = vpop.f32.mrb[0].mxu0
    %v1273 = vadd.f32 %v1233, %v1272
    %v1274 = vpop.f32.mrb[0].mxu0
    %v1275 = vpop.f32.mrb[0].mxu0
    %v1276 = vpop.f32.mrb[0].mxu0
    %1277 = vdwg.mxu0
    %v1278 = vsel %vm473, %v1273, -1e+30
    %v1279 = vsel %vm475, %v1278, -inf
    %1280 = vmax.xlane.f32.xlu0 %v1279
    %v1281 = vpop.xlane.xlu0 %1280
    %v1282 = vsub.f32 %v1278, %v1281
    %v1283 = vmul.f32 %v1282, 1.442695
    %v1284 = vpow.pop %v1283
    %v1285 = vsel %vm475, %v1284, 0.0
    %1286 = vadd.xlane.f32.xlu0 %v1285
    %v1287 = vpop.xlane.xlu0 %1286
    %v1288 = vrcp.pop %v1287
    %v1289 = vmul.f32 %v1284, %v1288
    %v1290 = vsub.f32 %v1289, %v489
    %v1291 = vsel %vm473, %v1290, 0.0
    %v1292 = vpack.c.bf16 %v1291, %v1291
    %1293 = vmatprep.subr.bf16.mxu0 0
    %1294 = vmatpush1.bf16.xpose.msra.mxu0 %v239
    %1295 = vmatprep.subr.bf16.mxu0 0
    %1296 = vmatpush1.bf16.xpose.msra.mxu0 %v240
    %1297 = vmatprep.subr.bf16.mxu0 0
    %1298 = vmatpush1.bf16.xpose.msra.mxu0 %v241
    %1299 = vmatprep.subr.bf16.mxu0 0
    %1300 = vmatpush1.bf16.xpose.msra.mxu0 %v242
    %1301 = vmatprep.subr.bf16.mxu0 0
    %1302 = vmatpush1.bf16.xpose.msra.mxu0 %v243
    %1303 = vmatprep.subr.bf16.mxu0 0
    %1304 = vmatpush1.bf16.xpose.msra.mxu0 %v244
    %1305 = vmatprep.subr.bf16.mxu0 0
    %1306 = vmatpush1.bf16.xpose.msra.mxu0 %v245
    %1307 = vmatprep.subr.bf16.mxu0 0
    %1308 = vmatpush1.bf16.xpose.msra.mxu0 %v246
    %1309 = vmatprep.subr.bf16.mxu0 0
    %1310 = vmatpush1.bf16.xpose.msra.mxu0 %v247
    %1311 = vmatprep.subr.bf16.mxu0 0
    %1312 = vmatpush1.bf16.xpose.msra.mxu0 %v248
    %1313 = vmatprep.subr.bf16.mxu0 0
    %1314 = vmatpush1.bf16.xpose.msra.mxu0 %v249
    %1315 = vmatprep.subr.bf16.mxu0 0
    %1316 = vmatpush1.bf16.xpose.msra.mxu0 %v250
    %1317 = vmatprep.subr.bf16.mxu0 0
    %1318 = vmatpush1.bf16.xpose.msra.mxu0 %v251
    %1319 = vmatprep.subr.bf16.mxu0 0
    %1320 = vmatpush1.bf16.xpose.msra.mxu0 %v252
    %1321 = vmatprep.subr.bf16.mxu0 0
    %1322 = vmatpush1.bf16.xpose.msra.mxu0 %v253
    %1323 = vmatprep.subr.bf16.mxu0 0
    %1324 = vmatpush1.bf16.xpose.msra.mxu0 %v254
    %1325 = vmatprep.mubr.bf16.mxu0 0
    %1326 = vmatmul.mubr.bf16.gmra.mrb[0].mxu0 %v1292
    %v1327 = vpop.f32.mrb[0].mxu0
    %v1328 = vadd.f32 0.0, %v1327
    %v1329 = vpop.f32.mrb[0].mxu0
    %v1330 = vadd.f32 0.0, %v1329
    %v1331 = vpop.f32.mrb[0].mxu0
    %v1332 = vpop.f32.mrb[0].mxu0
    %1333 = vdwg.mxu0
    %1334 = vmatprep.subr.bf16.mxu0 0
    %1335 = vmatpush1.bf16.xpose.msra.mxu0 %v255
    %1336 = vmatprep.subr.bf16.mxu0 0
    %1337 = vmatpush1.bf16.xpose.msra.mxu0 %v256
    %1338 = vmatprep.subr.bf16.mxu0 0
    %1339 = vmatpush1.bf16.xpose.msra.mxu0 %v257
    %1340 = vmatprep.subr.bf16.mxu0 0
    %1341 = vmatpush1.bf16.xpose.msra.mxu0 %v258
    %1342 = vmatprep.subr.bf16.mxu0 0
    %1343 = vmatpush1.bf16.xpose.msra.mxu0 %v259
    %1344 = vmatprep.subr.bf16.mxu0 0
    %1345 = vmatpush1.bf16.xpose.msra.mxu0 %v260
    %1346 = vmatprep.subr.bf16.mxu0 0
    %1347 = vmatpush1.bf16.xpose.msra.mxu0 %v261
    %1348 = vmatprep.subr.bf16.mxu0 0
    %1349 = vmatpush1.bf16.xpose.msra.mxu0 %v262
    %1350 = vmatprep.subr.bf16.mxu0 0
    %1351 = vmatpush1.bf16.xpose.msra.mxu0 %v263
    %1352 = vmatprep.subr.bf16.mxu0 0
    %1353 = vmatpush1.bf16.xpose.msra.mxu0 %v264
    %1354 = vmatprep.subr.bf16.mxu0 0
    %1355 = vmatpush1.bf16.xpose.msra.mxu0 %v265
    %1356 = vmatprep.subr.bf16.mxu0 0
    %1357 = vmatpush1.bf16.xpose.msra.mxu0 %v266
    %1358 = vmatprep.subr.bf16.mxu0 0
    %1359 = vmatpush1.bf16.xpose.msra.mxu0 %v267
    %1360 = vmatprep.subr.bf16.mxu0 0
    %1361 = vmatpush1.bf16.xpose.msra.mxu0 %v268
    %1362 = vmatprep.subr.bf16.mxu0 0
    %1363 = vmatpush1.bf16.xpose.msra.mxu0 %v269
    %1364 = vmatprep.subr.bf16.mxu0 0
    %1365 = vmatpush1.bf16.xpose.msra.mxu0 %v270
    %1366 = vmatprep.mubr.bf16.mxu0 0
    %1367 = vmatmul.mubr.bf16.gmra.mrb[0].mxu0 %v1292
    %v1368 = vpop.f32.mrb[0].mxu0
    %v1369 = vadd.f32 0.0, %v1368
    %v1370 = vpop.f32.mrb[0].mxu0
    %v1371 = vadd.f32 0.0, %v1370
    %v1372 = vpop.f32.mrb[0].mxu0
    %v1373 = vpop.f32.mrb[0].mxu0
    %1374 = vdwg.mxu0
    %1375 = vmatprep.subr.bf16.mxu0 0
    %1376 = vmatpush1.bf16.xpose.msra.mxu0 %v271
    %1377 = vmatprep.subr.bf16.mxu0 0
    %1378 = vmatpush1.bf16.xpose.msra.mxu0 %v272
    %1379 = vmatprep.subr.bf16.mxu0 0
    %1380 = vmatpush1.bf16.xpose.msra.mxu0 %v273
    %1381 = vmatprep.subr.bf16.mxu0 0
    %1382 = vmatpush1.bf16.xpose.msra.mxu0 %v274
    %1383 = vmatprep.subr.bf16.mxu0 0
    %1384 = vmatpush1.bf16.xpose.msra.mxu0 %v275
    %1385 = vmatprep.subr.bf16.mxu0 0
    %1386 = vmatpush1.bf16.xpose.msra.mxu0 %v276
    %1387 = vmatprep.subr.bf16.mxu0 0
    %1388 = vmatpush1.bf16.xpose.msra.mxu0 %v277
    %1389 = vmatprep.subr.bf16.mxu0 0
    %1390 = vmatpush1.bf16.xpose.msra.mxu0 %v278
    %1391 = vmatprep.subr.bf16.mxu0 0
    %1392 = vmatpush1.bf16.xpose.msra.mxu0 %v279
    %1393 = vmatprep.subr.bf16.mxu0 0
    %1394 = vmatpush1.bf16.xpose.msra.mxu0 %v280
    %1395 = vmatprep.subr.bf16.mxu0 0
    %1396 = vmatpush1.bf16.xpose.msra.mxu0 %v281
    %1397 = vmatprep.subr.bf16.mxu0 0
    %1398 = vmatpush1.bf16.xpose.msra.mxu0 %v282
    %1399 = vmatprep.subr.bf16.mxu0 0
    %1400 = vmatpush1.bf16.xpose.msra.mxu0 %v283
    %1401 = vmatprep.subr.bf16.mxu0 0
    %1402 = vmatpush1.bf16.xpose.msra.mxu0 %v284
    %1403 = vmatprep.subr.bf16.mxu0 0
    %1404 = vmatpush1.bf16.xpose.msra.mxu0 %v285
    %1405 = vmatprep.subr.bf16.mxu0 0
    %1406 = vmatpush1.bf16.xpose.msra.mxu0 %v286
    %1407 = vmatprep.mubr.bf16.mxu0 0
    %1408 = vmatmul.mubr.bf16.gmra.mrb[0].mxu0 %v1292
    %v1409 = vpop.f32.mrb[0].mxu0
    %v1410 = vadd.f32 0.0, %v1409
    %v1411 = vpop.f32.mrb[0].mxu0
    %v1412 = vadd.f32 0.0, %v1411
    %v1413 = vpop.f32.mrb[0].mxu0
    %v1414 = vpop.f32.mrb[0].mxu0
    %1415 = vdwg.mxu0
    %1416 = vmatprep.subr.bf16.mxu0 0
    %1417 = vmatpush1.bf16.xpose.msra.mxu0 %v287
    %1418 = vmatprep.subr.bf16.mxu0 0
    %1419 = vmatpush1.bf16.xpose.msra.mxu0 %v288
    %1420 = vmatprep.subr.bf16.mxu0 0
    %1421 = vmatpush1.bf16.xpose.msra.mxu0 %v289
    %1422 = vmatprep.subr.bf16.mxu0 0
    %1423 = vmatpush1.bf16.xpose.msra.mxu0 %v290
    %1424 = vmatprep.subr.bf16.mxu0 0
    %1425 = vmatpush1.bf16.xpose.msra.mxu0 %v291
    %1426 = vmatprep.subr.bf16.mxu0 0
    %1427 = vmatpush1.bf16.xpose.msra.mxu0 %v292
    %1428 = vmatprep.subr.bf16.mxu0 0
    %1429 = vmatpush1.bf16.xpose.msra.mxu0 %v293
    %1430 = vmatprep.subr.bf16.mxu0 0
    %1431 = vmatpush1.bf16.xpose.msra.mxu0 %v294
    %1432 = vmatprep.subr.bf16.mxu0 0
    %1433 = vmatpush1.bf16.xpose.msra.mxu0 %v295
    %1434 = vmatprep.subr.bf16.mxu0 0
    %1435 = vmatpush1.bf16.xpose.msra.mxu0 %v296
    %1436 = vmatprep.subr.bf16.mxu0 0
    %1437 = vmatpush1.bf16.xpose.msra.mxu0 %v297
    %1438 = vmatprep.subr.bf16.mxu0 0
    %1439 = vmatpush1.bf16.xpose.msra.mxu0 %v298
    %1440 = vmatprep.subr.bf16.mxu0 0
    %1441 = vmatpush1.bf16.xpose.msra.mxu0 %v299
    %1442 = vmatprep.subr.bf16.mxu0 0
    %1443 = vmatpush1.bf16.xpose.msra.mxu0 %v300
    %1444 = vmatprep.subr.bf16.mxu0 0
    %1445 = vmatpush1.bf16.xpose.msra.mxu0 %v301
    %1446 = vmatprep.subr.bf16.mxu0 0
    %1447 = vmatpush1.bf16.xpose.msra.mxu0 %v302
    %1448 = vmatprep.mubr.bf16.mxu0 0
    %1449 = vmatmul.mubr.bf16.gmra.mrb[0].mxu0 %v1292
    %v1450 = vpop.f32.mrb[0].mxu0
    %v1451 = vadd.f32 0.0, %v1450
    %v1452 = vpop.f32.mrb[0].mxu0
    %v1453 = vadd.f32 0.0, %v1452
    %v1454 = vpop.f32.mrb[0].mxu0
    %v1455 = vpop.f32.mrb[0].mxu0
    %1456 = vdwg.mxu0
    %v1457 = vmul.f32 %v1328, %v1328
    %v1458 = vmul.f32 %v1330, %v1330
    %v1459 = vmul.f32 %v1369, %v1369
    %v1460 = vmul.f32 %v1371, %v1371
    %v1461 = vmul.f32 %v1410, %v1410
    %v1462 = vmul.f32 %v1412, %v1412
    %v1463 = vmul.f32 %v1451, %v1451
    %v1464 = vmul.f32 %v1453, %v1453
    %v1465 = vsel %vm475, %v1457, 0.0
    %v1466 = vsel %vm475, %v1458, 0.0
    %v1467 = vadd.f32 %v1465, %v1466
    %v1468 = vsel %vm475, %v1459, 0.0
    %v1469 = vadd.f32 %v1467, %v1468
    %v1470 = vsel %vm475, %v1460, 0.0
    %v1471 = vadd.f32 %v1469, %v1470
    %v1472 = vsel %vm475, %v1461, 0.0
    %v1473 = vadd.f32 %v1471, %v1472
    %v1474 = vsel %vm475, %v1462, 0.0
    %v1475 = vadd.f32 %v1473, %v1474
    %v1476 = vsel %vm475, %v1463, 0.0
    %v1477 = vadd.f32 %v1475, %v1476
    %v1478 = vsel %vm475, %v1464, 0.0
    %v1479 = vadd.f32 %v1477, %v1478
    %1480 = vadd.xlane.f32.xlu0 %v1479
    %v1481 = vpop.xlane.xlu0 %1480
    %v1482 = vrsqrt.pop %v1481
    %v1483 = vmul.f32 %v1481, %v1482
    %vm1484 = vcmp.eq.f32.partialorder %v1481, inf
    %v1485 = vsel %vm1484, %v1481, %v1483
    %vm1486 = vcmp.eq.f32.partialorder %v1481, 0.0
    %v1487 = vand.u32 %v1481, 2147483648
    %v1488 = vsel %vm1486, %v1487, %v1485
    %v1489 = vadd.f32 %v1488, 1e-10
    %v1490 = vrcp.pop %v1489
    %v1491 = vmul.f32 %v1328, %v1490
    %v1492 = vmul.f32 %v1330, %v1490
    %v1493 = vmul.f32 %v1369, %v1490
    %v1494 = vmul.f32 %v1371, %v1490
    %v1495 = vmul.f32 %v1410, %v1490
    %v1496 = vmul.f32 %v1412, %v1490
    %v1497 = vmul.f32 %v1451, %v1490
    %v1498 = vmul.f32 %v1453, %v1490
    %v1499 = vmul.f32 %v1491, 2.0
    %v1500 = vmul.f32 %v1492, 2.0
    %v1501 = vmul.f32 %v1493, 2.0
    %v1502 = vmul.f32 %v1494, 2.0
    %v1503 = vmul.f32 %v1495, 2.0
    %v1504 = vmul.f32 %v1496, 2.0
    %v1505 = vmul.f32 %v1497, 2.0
    %v1506 = vmul.f32 %v1498, 2.0
    %v1515 = vcombine.low %v1499, %v1500
    %v1516 = vcombine.low %v1501, %v1502
    %v1518 = vunpack.c.l.s4 1983009808
    %v1519 = vunpack.c.0.s8 %v1518
    %v1520 = vlaneseq
    %v1521 = vshrl.u32 %v1520, 7
    %v1522 = vsub.s32 %v1519, %v1521
    %v1523 = vrot.slane %v1515, %v1522
    %v1525 = vunpack.c.l.s4 1983009808
    %v1526 = vunpack.c.0.s8 %v1525
    %v1527 = vlaneseq
    %v1528 = vshrl.u32 %v1527, 7
    %v1529 = vsub.s32 %v1526, %v1528
    %v1530 = vrot.slane %v1516, %v1529
    %v1531 = vcombine.low %v1523, %v1530
    %v1532 = vcombine.low %v1503, %v1504
    %v1533 = vcombine.low %v1505, %v1506
    %v1535 = vunpack.c.l.s4 1983009808
    %v1536 = vunpack.c.0.s8 %v1535
    %v1537 = vlaneseq
    %v1538 = vshrl.u32 %v1537, 7
    %v1539 = vsub.s32 %v1536, %v1538
    %v1540 = vrot.slane %v1532, %v1539
    %v1542 = vunpack.c.l.s4 1983009808
    %v1543 = vunpack.c.0.s8 %v1542
    %v1544 = vlaneseq
    %v1545 = vshrl.u32 %v1544, 7
    %v1546 = vsub.s32 %v1543, %v1545
    %v1547 = vrot.slane %v1533, %v1546
    %v1548 = vcombine.low %v1540, %v1547
    %v1551 = vadd.f32 %v56, %v1531
    %v1552 = vadd.f32 %v57, %v1548
    %v1555 = vcombine.high %v1551, %v1551
    %v1557 = vunpack.c.l.s4 1983009808
    %v1558 = vunpack.c.0.s8 %v1557
    %v1559 = vlaneseq
    %v1560 = vshrl.u32 %v1559, 7
    %v1561 = vsub.s32 %v1558, %v1560
    %v1562 = vrot.slane %v1551, %v1561
    %v1564 = vunpack.c.l.s4 1983009808
    %v1565 = vunpack.c.0.s8 %v1564
    %v1566 = vlaneseq
    %v1567 = vshrl.u32 %v1566, 7
    %v1568 = vsub.s32 %v1565, %v1567
    %v1569 = vrot.slane %v1555, %v1568
    %v1570 = vcombine.high %v1562, %v1562
    %v1571 = vcombine.high %v1569, %v1569
    %v1572 = vcombine.high %v1552, %v1552
    %v1574 = vunpack.c.l.s4 1983009808
    %v1575 = vunpack.c.0.s8 %v1574
    %v1576 = vlaneseq
    %v1577 = vshrl.u32 %v1576, 7
    %v1578 = vsub.s32 %v1575, %v1577
    %v1579 = vrot.slane %v1552, %v1578
    %v1581 = vunpack.c.l.s4 1983009808
    %v1582 = vunpack.c.0.s8 %v1581
    %v1583 = vlaneseq
    %v1584 = vshrl.u32 %v1583, 7
    %v1585 = vsub.s32 %v1582, %v1584
    %v1586 = vrot.slane %v1572, %v1585
    %v1587 = vcombine.high %v1579, %v1579
    %v1588 = vcombine.high %v1586, %v1586
    %v1597 = vpack.c.bf16 %v1562, %v1562
    %v1598 = vpack.c.bf16 %v1570, %v1570
    %v1599 = vpack.c.bf16 %v1569, %v1569
    %v1600 = vpack.c.bf16 %v1571, %v1571
    %v1601 = vpack.c.bf16 %v1579, %v1579
    %v1602 = vpack.c.bf16 %v1587, %v1587
    %v1603 = vpack.c.bf16 %v1586, %v1586
    %v1604 = vpack.c.bf16 %v1588, %v1588
    %1605 = vmatprep.subr.bf16.mxu0 0
    %1606 = vmatpush1.bf16.msra.mxu0 %v239
    %1607 = vmatprep.subr.bf16.mxu0 0
    %1608 = vmatpush1.bf16.msra.mxu0 %v240
    %1609 = vmatprep.subr.bf16.mxu0 0
    %1610 = vmatpush1.bf16.msra.mxu0 %v241
    %1611 = vmatprep.subr.bf16.mxu0 0
    %1612 = vmatpush1.bf16.msra.mxu0 %v242
    %1613 = vmatprep.subr.bf16.mxu0 0
    %1614 = vmatpush1.bf16.msra.mxu0 %v243
    %1615 = vmatprep.subr.bf16.mxu0 0
    %1616 = vmatpush1.bf16.msra.mxu0 %v244
    %1617 = vmatprep.subr.bf16.mxu0 0
    %1618 = vmatpush1.bf16.msra.mxu0 %v245
    %1619 = vmatprep.subr.bf16.mxu0 0
    %1620 = vmatpush1.bf16.msra.mxu0 %v246
    %1621 = vmatprep.subr.bf16.mxu0 0
    %1622 = vmatpush1.bf16.msra.mxu0 %v247
    %1623 = vmatprep.subr.bf16.mxu0 0
    %1624 = vmatpush1.bf16.msra.mxu0 %v248
    %1625 = vmatprep.subr.bf16.mxu0 0
    %1626 = vmatpush1.bf16.msra.mxu0 %v249
    %1627 = vmatprep.subr.bf16.mxu0 0
    %1628 = vmatpush1.bf16.msra.mxu0 %v250
    %1629 = vmatprep.subr.bf16.mxu0 0
    %1630 = vmatpush1.bf16.msra.mxu0 %v251
    %1631 = vmatprep.subr.bf16.mxu0 0
    %1632 = vmatpush1.bf16.msra.mxu0 %v252
    %1633 = vmatprep.subr.bf16.mxu0 0
    %1634 = vmatpush1.bf16.msra.mxu0 %v253
    %1635 = vmatprep.subr.bf16.mxu0 0
    %1636 = vmatpush1.bf16.msra.mxu0 %v254
    %1637 = vmatprep.mubr.bf16.mxu0 %v1598
    %1638 = vmatmul.mubr.bf16.gmra.mrb[0].mxu0 %v1597
    %v1639 = vpop.f32.mrb[0].mxu0
    %v1640 = vadd.f32 %v310, %v1639
    %v1641 = vpop.f32.mrb[0].mxu0
    %v1642 = vpop.f32.mrb[0].mxu0
    %v1643 = vpop.f32.mrb[0].mxu0
    %1644 = vdwg.mxu0
    %1645 = vmatprep.subr.bf16.mxu0 0
    %1646 = vmatpush1.bf16.msra.mxu0 %v255
    %1647 = vmatprep.subr.bf16.mxu0 0
    %1648 = vmatpush1.bf16.msra.mxu0 %v256
    %1649 = vmatprep.subr.bf16.mxu0 0
    %1650 = vmatpush1.bf16.msra.mxu0 %v257
    %1651 = vmatprep.subr.bf16.mxu0 0
    %1652 = vmatpush1.bf16.msra.mxu0 %v258
    %1653 = vmatprep.subr.bf16.mxu0 0
    %1654 = vmatpush1.bf16.msra.mxu0 %v259
    %1655 = vmatprep.subr.bf16.mxu0 0
    %1656 = vmatpush1.bf16.msra.mxu0 %v260
    %1657 = vmatprep.subr.bf16.mxu0 0
    %1658 = vmatpush1.bf16.msra.mxu0 %v261
    %1659 = vmatprep.subr.bf16.mxu0 0
    %1660 = vmatpush1.bf16.msra.mxu0 %v262
    %1661 = vmatprep.subr.bf16.mxu0 0
    %1662 = vmatpush1.bf16.msra.mxu0 %v263
    %1663 = vmatprep.subr.bf16.mxu0 0
    %1664 = vmatpush1.bf16.msra.mxu0 %v264
    %1665 = vmatprep.subr.bf16.mxu0 0
    %1666 = vmatpush1.bf16.msra.mxu0 %v265
    %1667 = vmatprep.subr.bf16.mxu0 0
    %1668 = vmatpush1.bf16.msra.mxu0 %v266
    %1669 = vmatprep.subr.bf16.mxu0 0
    %1670 = vmatpush1.bf16.msra.mxu0 %v267
    %1671 = vmatprep.subr.bf16.mxu0 0
    %1672 = vmatpush1.bf16.msra.mxu0 %v268
    %1673 = vmatprep.subr.bf16.mxu0 0
    %1674 = vmatpush1.bf16.msra.mxu0 %v269
    %1675 = vmatprep.subr.bf16.mxu0 0
    %1676 = vmatpush1.bf16.msra.mxu0 %v270
    %1677 = vmatprep.mubr.bf16.mxu0 %v1600
    %1678 = vmatmul.mubr.bf16.gmra.mrb[0].mxu0 %v1599
    %v1679 = vpop.f32.mrb[0].mxu0
    %v1680 = vadd.f32 %v1640, %v1679
    %v1681 = vpop.f32.mrb[0].mxu0
    %v1682 = vpop.f32.mrb[0].mxu0
    %v1683 = vpop.f32.mrb[0].mxu0
    %1684 = vdwg.mxu0
    %1685 = vmatprep.subr.bf16.mxu0 0
    %1686 = vmatpush1.bf16.msra.mxu0 %v271
    %1687 = vmatprep.subr.bf16.mxu0 0
    %1688 = vmatpush1.bf16.msra.mxu0 %v272
    %1689 = vmatprep.subr.bf16.mxu0 0
    %1690 = vmatpush1.bf16.msra.mxu0 %v273
    %1691 = vmatprep.subr.bf16.mxu0 0
    %1692 = vmatpush1.bf16.msra.mxu0 %v274
    %1693 = vmatprep.subr.bf16.mxu0 0
    %1694 = vmatpush1.bf16.msra.mxu0 %v275
    %1695 = vmatprep.subr.bf16.mxu0 0
    %1696 = vmatpush1.bf16.msra.mxu0 %v276
    %1697 = vmatprep.subr.bf16.mxu0 0
    %1698 = vmatpush1.bf16.msra.mxu0 %v277
    %1699 = vmatprep.subr.bf16.mxu0 0
    %1700 = vmatpush1.bf16.msra.mxu0 %v278
    %1701 = vmatprep.subr.bf16.mxu0 0
    %1702 = vmatpush1.bf16.msra.mxu0 %v279
    %1703 = vmatprep.subr.bf16.mxu0 0
    %1704 = vmatpush1.bf16.msra.mxu0 %v280
    %1705 = vmatprep.subr.bf16.mxu0 0
    %1706 = vmatpush1.bf16.msra.mxu0 %v281
    %1707 = vmatprep.subr.bf16.mxu0 0
    %1708 = vmatpush1.bf16.msra.mxu0 %v282
    %1709 = vmatprep.subr.bf16.mxu0 0
    %1710 = vmatpush1.bf16.msra.mxu0 %v283
    %1711 = vmatprep.subr.bf16.mxu0 0
    %1712 = vmatpush1.bf16.msra.mxu0 %v284
    %1713 = vmatprep.subr.bf16.mxu0 0
    %1714 = vmatpush1.bf16.msra.mxu0 %v285
    %1715 = vmatprep.subr.bf16.mxu0 0
    %1716 = vmatpush1.bf16.msra.mxu0 %v286
    %1717 = vmatprep.mubr.bf16.mxu0 %v1602
    %1718 = vmatmul.mubr.bf16.gmra.mrb[0].mxu0 %v1601
    %v1719 = vpop.f32.mrb[0].mxu0
    %v1720 = vadd.f32 %v1680, %v1719
    %v1721 = vpop.f32.mrb[0].mxu0
    %v1722 = vpop.f32.mrb[0].mxu0
    %v1723 = vpop.f32.mrb[0].mxu0
    %1724 = vdwg.mxu0
    %1725 = vmatprep.subr.bf16.mxu0 0
    %1726 = vmatpush1.bf16.msra.mxu0 %v287
    %1727 = vmatprep.subr.bf16.mxu0 0
    %1728 = vmatpush1.bf16.msra.mxu0 %v288
    %1729 = vmatprep.subr.bf16.mxu0 0
    %1730 = vmatpush1.bf16.msra.mxu0 %v289
    %1731 = vmatprep.subr.bf16.mxu0 0
    %1732 = vmatpush1.bf16.msra.mxu0 %v290
    %1733 = vmatprep.subr.bf16.mxu0 0
    %1734 = vmatpush1.bf16.msra.mxu0 %v291
    %1735 = vmatprep.subr.bf16.mxu0 0
    %1736 = vmatpush1.bf16.msra.mxu0 %v292
    %1737 = vmatprep.subr.bf16.mxu0 0
    %1738 = vmatpush1.bf16.msra.mxu0 %v293
    %1739 = vmatprep.subr.bf16.mxu0 0
    %1740 = vmatpush1.bf16.msra.mxu0 %v294
    %1741 = vmatprep.subr.bf16.mxu0 0
    %1742 = vmatpush1.bf16.msra.mxu0 %v295
    %1743 = vmatprep.subr.bf16.mxu0 0
    %1744 = vmatpush1.bf16.msra.mxu0 %v296
    %1745 = vmatprep.subr.bf16.mxu0 0
    %1746 = vmatpush1.bf16.msra.mxu0 %v297
    %1747 = vmatprep.subr.bf16.mxu0 0
    %1748 = vmatpush1.bf16.msra.mxu0 %v298
    %1749 = vmatprep.subr.bf16.mxu0 0
    %1750 = vmatpush1.bf16.msra.mxu0 %v299
    %1751 = vmatprep.subr.bf16.mxu0 0
    %1752 = vmatpush1.bf16.msra.mxu0 %v300
    %1753 = vmatprep.subr.bf16.mxu0 0
    %1754 = vmatpush1.bf16.msra.mxu0 %v301
    %1755 = vmatprep.subr.bf16.mxu0 0
    %1756 = vmatpush1.bf16.msra.mxu0 %v302
    %1757 = vmatprep.mubr.bf16.mxu0 %v1604
    %1758 = vmatmul.mubr.bf16.gmra.mrb[0].mxu0 %v1603
    %v1759 = vpop.f32.mrb[0].mxu0
    %v1760 = vadd.f32 %v1720, %v1759
    %v1761 = vpop.f32.mrb[0].mxu0
    %v1762 = vpop.f32.mrb[0].mxu0
    %v1763 = vpop.f32.mrb[0].mxu0
    %1764 = vdwg.mxu0
    %v1765 = vsel %vm473, %v1760, -1e+30
    %v1766 = vsel %vm475, %v1765, -inf
    %1767 = vmax.xlane.f32.xlu0 %v1766
    %v1768 = vpop.xlane.xlu0 %1767
    %v1769 = vsub.f32 %v1765, %v1768
    %v1770 = vmul.f32 %v1769, 1.442695
    %v1771 = vpow.pop %v1770
    %v1772 = vsel %vm475, %v1771, 0.0
    %1773 = vadd.xlane.f32.xlu0 %v1772
    %v1774 = vpop.xlane.xlu0 %1773
    %v1775 = vlog2.pop %v1774
    %v1776 = vmul.f32 %v1775, 0.6931472
    %v1777 = vsub.f32 %v1769, %v1776
    %v1778 = vsub.f32 %v487, %v1777
    %v1779 = vmul.f32 %v489, %v1778
    %v1780 = vsel %vm473, %v1779, 0.0
    %v1781 = vsel %vm475, %v1780, 0.0
    %1782 = vadd.xlane.f32.xlu0 %v1781
    %v1783 = vpop.xlane.xlu0 %1782
    %v1784 = vsel %vm475, %v1783, 0.0
    %v1785 = vrot.slane %v1784, 4
    %v1786 = vadd.f32 %v1784, %v1785
    %v1787 = vrot.slane %v1786, 2
    %v1788 = vadd.f32 %v1786, %v1787
    %v1789 = vrot.slane %v1788, 1
    %v1790 = vadd.f32 %v1788, %v1789
    %v1791 = vmul.f32 %v1790, 0.5
    %vm1792 = vcmask 0
    %1793 = vst.msk [vmem:[#allocation8] sm:$0x1] %vm1792, %v1791
    // Predicated region
    $region30: #{tpu_custom_call.1} parent=1 // pred_check
      _
    $region31: #{tpu_custom_call.1} parent=1 // pred_check_branch
      %1795 = sbr.rel (0) target = $region33
    $region32: #{tpu_custom_call.1} parent=1 // pred_region
      %s1797 = ssub.s32 16, 16
      %1798 = vsyncadd [#allocation4], %s1797
      %s1800 = sshll.u32 [#allocation8], 4
      %s1801 = int_to_ptr.vmem [resolvable:$true] %s1800
      %1803 = dma.vmem_to_hbm [thread:$0]  %s1801, 16, %s4, [#allocation4]
    $region33: #{tpu_custom_call.1} parent=1 // pred_fallthru
      _
    // Predicated region
    $region34: #{tpu_custom_call.1} parent=1 // pred_check
      _
    $region35: #{tpu_custom_call.1} parent=1 // pred_check_branch
      %1805 = sbr.rel (0) target = $region37
    $region36: #{tpu_custom_call.1} parent=1 // pred_region
      %1806 = dma.done [#allocation4], 16
    $region37: #{tpu_custom_call.1} parent=1 // pred_fallthru
      _
    %1807 = vsyncpa [#allocation3], 1
    %1808 = vsyncpa [#allocation6], 1
    %1809 = vsyncpa [#allocation4], 1

</llo_original>
